<compile_context>
chip_gen: v5e
topology: v5e:2x2
jax: 0.10.0
libtpu: 0.0.40
codegen_flags: <defaults>
</compile_context>

<pallas_src>
import functools

import numpy as np
import jax
import jax.numpy as jnp
from jax.experimental import pallas as pl
from jax.experimental.pallas import tpu as pltpu

LN_EPS = 1e-5
NEG_INF = -1e9  # additive mask value; exp underflows to exactly 0 (no fully-masked rows exist)


# ----------------------------- in-kernel helpers -----------------------------

def _erf_poly(x):
    # Abramowitz & Stegun 7.1.26 rational approximation, |err| < 1.5e-7 (fp32);
    # used so that exact (erf-based) GELU lowers on Mosaic.
    a1, a2, a3, a4, a5 = 0.254829592, -0.284496736, 1.421413741, -1.453152027, 1.061405429
    p = 0.3275911
    s = jnp.where(x >= 0.0, 1.0, -1.0)
    z = jnp.abs(x)
    # approx reciprocal -> EUP slot (overlaps the exp below), ~1e-4 rel error.
    t = pl.reciprocal(1.0 + p * z, approx=True)
    poly = t * (a1 + t * (a2 + t * (a3 + t * (a4 + t * a5))))
    return s * (1.0 - poly * jnp.exp(-z * z))


def _gelu_exact(x):
    return 0.5 * x * (1.0 + _erf_poly(x * 0.7071067811865476))


def _layernorm(x, gamma, beta):
    mean = jnp.mean(x, axis=-1, keepdims=True)
    var = jnp.mean((x - mean) ** 2, axis=-1, keepdims=True)
    return (x - mean) * jax.lax.rsqrt(var + LN_EPS) * gamma + beta


# ------------------------------- fused Swin-block kernel -------------------------------

def _swin_block_kernel(*refs, nh, hd, wblk, p2, has_mask):
    """One (batch, window-chunk) tile: full SWINBlock (MSA + MLP, both residuals)."""
    if has_mask:
        (x_ref, ln1g_ref, ln1b_ref, wqk_ref, bqk_ref, wvo_ref, bvo_ref, bo_ref,
         bias_ref, mask_ref,
         ln2g_ref, ln2b_ref, w1_ref, b1_ref, w2_ref, b2_ref, o_ref) = refs
    else:
        (x_ref, ln1g_ref, ln1b_ref, wqk_ref, bqk_ref, wvo_ref, bvo_ref, bo_ref,
         bias_ref,
         ln2g_ref, ln2b_ref, w1_ref, b1_ref, w2_ref, b2_ref, o_ref) = refs
        mask_ref = None

    C = nh * hd
    M = wblk * p2          # tokens in this tile
    F = 2 * hd             # per-head [q | k] width in the packed projection

    x = x_ref[0].astype(jnp.float32)                                 # (M, C)

    # ---- attention branch -------------------------------------------------
    xn = _layernorm(x, ln1g_ref[0], ln1b_ref[0])                     # (M, C)

    # Single wide projections; weights packed head-major in the wrapper.
    # Softmax scale folded into the Q columns, Wo folded into the V columns.
    qk2 = jnp.dot(xn, wqk_ref[...],
                  preferred_element_type=jnp.float32) + bqk_ref[...]  # (M, nh*2hd)
    vo2 = jnp.dot(xn, wvo_ref[...],
                  preferred_element_type=jnp.float32) + bvo_ref[...]  # (M, nh*C) lane-dense

    bias_all = bias_ref[...]                                         # (nh, p2, p2)
    mask = mask_ref[...] if has_mask else None                       # (wblk, p2, p2)

    attn = None
    for h in range(nh):   # nh = C // head_dim is tiny; static unroll, lane slices only
        q_h = qk2[:, h * F:h * F + hd].reshape(wblk, p2, hd)          # (wblk, P2, HD)
        k_h = qk2[:, h * F + hd:(h + 1) * F].reshape(wblk, p2, hd)
        vo_h = vo2[:, h * C:(h + 1) * C].reshape(wblk, p2, C)         # (wblk, P2, C)

        sim = jnp.einsum('wpd,wqd->wpq', q_h, k_h,
                         preferred_element_type=jnp.float32)          # (wblk, P2, P2)
        sim = sim + bias_all[h]
        if has_mask:
            sim = sim + mask
        sim = sim - jnp.max(sim, axis=-1, keepdims=True)
        e = jnp.exp(sim)
        inv = pl.reciprocal(jnp.sum(e, axis=-1, keepdims=True), approx=True)
        ah = jnp.einsum('wpq,wqc->wpc', e * inv, vo_h,
                        preferred_element_type=jnp.float32)           # (wblk, P2, C)
        ah = ah.reshape(M, C)
        attn = ah if attn is None else attn + ah                      # head reduce

    y = x + attn + bo_ref[0]                                          # residual + out-proj bias

    # ---- MLP branch (fused, per-token) -------------------------------------
    yn = _layernorm(y, ln2g_ref[0], ln2b_ref[0])
    h1 = jnp.dot(yn, w1_ref[...], preferred_element_type=jnp.float32) + b1_ref[0]
    h1 = _gelu_exact(h1)
    out = y + jnp.dot(h1, w2_ref[...], preferred_element_type=jnp.float32) + b2_ref[0]

    o_ref[0] = out.astype(o_ref.dtype)


# ------------------------------ pallas_call wrapper ---------------------------

def _token_cap():
    """Per-generation token cap for one tile: v7x has 64 MiB VMEM per TensorCore
    (keep ~1024 tokens); v5e/v6e (128 MiB) take ~2048-token tiles."""
    cap = 1024
    try:
        vmem = getattr(pltpu.get_tpu_info(), "vmem_capacity_bytes", 0)
        if vmem and vmem >= 100 * 1024 * 1024:
            cap = 2048
    except Exception:
        pass
    return cap


def _pick_wblk(nw, p2, batch, cap_tokens, min_steps=4):
    """Windows per grid step: as large as the token cap allows, while keeping a
    few grid steps alive for megacore sharding / DMA-compute pipelining."""
    wblk = max(1, min(nw, cap_tokens // p2))
    while wblk > 1 and batch * (-(-nw // wblk)) < min_steps:
        wblk = -(-wblk // 2)
    return wblk


def _prepare_attn_params(p, nh, hd, scale):
    """Pack weights head-major into single 2-D projection matrices; fold the
    softmax scale into Q and the output projection into the value projection
    (exact linear-algebra identities)."""
    C = nh * hd
    wqkv, bqkv = p["w_qkv"], p["b_qkv"]
    wq = wqkv[:, :C].reshape(C, nh, hd) * scale        # (C, NH, HD)
    wk = wqkv[:, C:2 * C].reshape(C, nh, hd)
    wv = wqkv[:, 2 * C:].reshape(C, nh, hd)
    bq = bqkv[:C].reshape(nh, hd) * scale
    bk = bqkv[C:2 * C].reshape(nh, hd)
    bv = bqkv[2 * C:].reshape(nh, hd)
    wo_h = p["w_o"].reshape(nh, hd, C)                 # (NH, HD, C)

    # columns [h*2hd : h*2hd+hd] = q_h (scaled), next hd = k_h
    w_qk = jnp.concatenate([wq, wk], axis=-1).reshape(C, nh * 2 * hd)   # (C, NH*2HD)
    b_qk = jnp.concatenate([bq, bk], axis=-1).reshape(1, nh * 2 * hd)
    # columns [h*C : (h+1)*C] = Wv_h @ Wo_h
    w_vo = jnp.einsum('chd,hdf->chf', wv, wo_h).reshape(C, nh * C)      # (C, NH*C)
    b_vo = jnp.einsum('hd,hdf->hf', bv, wo_h).reshape(1, nh * C)
    return w_qk, b_qk, w_vo, b_vo


def fused_swin_block(xw, p, w_qk, b_qk, w_vo, b_vo, bias, mask, nh, hd, p2, nw):
    """xw: (B, NW*P2, C) windowed tokens -> same shape, full SWINBlock applied."""
    B, T, C = xw.shape
    cap = _token_cap()
    wblk = _pick_wblk(nw, p2, B, cap)
    nwp = -(-nw // wblk) * wblk
    if nwp != nw:
        # pad to a whole number of window-chunks; padded windows' outputs are dropped
        xw = jnp.pad(xw, ((0, 0), (0, (nwp - nw) * p2), (0, 0)))
        if mask is not None:
            mask = jnp.pad(mask, ((0, nwp - nw), (0, 0), (0, 0)))
    M = wblk * p2
    has_mask = mask is not None

    kernel = functools.partial(_swin_block_kernel, nh=nh, hd=hd,
                               wblk=wblk, p2=p2, has_mask=has_mask)

    def const(shape):
        return pl.BlockSpec(shape, lambda b, wc: (0,) * len(shape))

    in_specs = [
        pl.BlockSpec((1, M, C), lambda b, wc: (b, wc, 0)),       # token tile (WBLK windows)
        const((1, C)), const((1, C)),                            # ln1 gamma/beta
        const((C, 2 * nh * hd)), const((1, 2 * nh * hd)),        # packed Q|K proj
        const((C, nh * C)), const((1, nh * C)),                  # fused V@Wo proj
        const((1, C)),                                           # out-proj bias
        const((nh, p2, p2)),                                     # rel-pos bias
    ]
    args = [xw,
            p["ln1_g"].reshape(1, C), p["ln1_b"].reshape(1, C),
            w_qk, b_qk, w_vo, b_vo,
            p["b_o"].reshape(1, C),
            bias]
    if has_mask:
        in_specs.append(pl.BlockSpec((wblk, p2, p2), lambda b, wc: (wc, 0, 0)))
        args.append(mask)
    in_specs += [const((1, C)), const((1, C)),                   # ln2 gamma/beta
                 const((C, 4 * C)), const((1, 4 * C)),           # mlp fc1
                 const((4 * C, C)), const((1, C))]               # mlp fc2
    args += [p["ln2_g"].reshape(1, C), p["ln2_b"].reshape(1, C),
             p["w1"], p["b1"].reshape(1, 4 * C),
             p["w2"], p["b2"].reshape(1, C)]

    vmem_limit = (48 if cap >= 2048 else 32) * 1024 * 1024

    y = pl.pallas_call(
        kernel,
        out_shape=jax.ShapeDtypeStruct((B, nwp * p2, C), xw.dtype),
        grid_spec=pltpu.PrefetchScalarGridSpec(
            num_scalar_prefetch=0,
            grid=(B, nwp // wblk),
            in_specs=in_specs,
            out_specs=pl.BlockSpec((1, M, C), lambda b, wc: (b, wc, 0)),
        ),
        compiler_params=pltpu.CompilerParams(
            dimension_semantics=("parallel", "parallel"),
            vmem_limit_bytes=vmem_limit),
    )(*args)
    return y[:, :T, :] if nwp != nw else y


# ------------------------------- JAX glue (model) ------------------------------

def relative_embedding(rel_params, ws):
    cord = np.array([[i, j] for i in range(ws) for j in range(ws)])
    relation = cord[:, None, :] - cord[None, :, :] + ws - 1        # (P2, P2, 2)
    return rel_params[:, relation[:, :, 0], relation[:, :, 1]]     # (NH, P2, P2)


def make_sw_mask(hw, ww, p, shift):
    m = np.zeros((hw, ww, p, p, p, p), dtype=bool)
    s = p - shift
    m[-1, :, :s, :, s:, :] = True
    m[-1, :, s:, :, :s, :] = True
    m[:, -1, :, :s, :, s:] = True
    m[:, -1, :, s:, :, :s] = True
    m = m.reshape(hw * ww, p * p, p * p)
    return jnp.asarray(np.where(m, NEG_INF, 0.0).astype(np.float32))


def swin_block_forward(x, p, block_type, ws, head_dim):
    B, H, W, C = x.shape
    nh = C // head_dim
    p2 = ws * ws
    shift = ws // 2 if block_type == "SW" else 0
    xr = jnp.roll(x, shift=(-shift, -shift), axis=(1, 2)) if shift else x
    hw, ww = H // ws, W // ws
    nw = hw * ww
    # TODO(synk): window partition/un-partition stays XLA glue; moving it into
    # a 3-D-grid BlockSpec would save one full HBM round trip per block.
    xw = (xr.reshape(B, hw, ws, ww, ws, C)
            .transpose(0, 1, 3, 2, 4, 5)
            .reshape(B, nw * p2, C))
    bias = relative_embedding(p["rel"], ws)                               # (NH, P2, P2)
    w_qk, b_qk, w_vo, b_vo = _prepare_attn_params(p, nh, head_dim,
                                                  head_dim ** (-0.5))
    mask = make_sw_mask(hw, ww, ws, shift) if block_type == "SW" else None
    y = fused_swin_block(xw, p, w_qk, b_qk, w_vo, b_vo, bias, mask,
                         nh, head_dim, p2, nw)                            # (B, NW*P2, C)
    y = (y.reshape(B, hw, ww, ws, ws, C)
           .transpose(0, 1, 3, 2, 4, 5)
           .reshape(B, H, W, C))
    if shift:
        y = jnp.roll(y, shift=(shift, shift), axis=(1, 2))
    return y


def pscf_global_block(x_nchw, params, ws, head_dim):
    # layout: NCHW in / NCHW out (matching PyTorch), NHWC internally.
    B, C, H, W = x_nchw.shape
    pad_b, pad_r = (-H) % ws, (-W) % ws
    x = jnp.transpose(x_nchw, (0, 2, 3, 1))
    if pad_b or pad_r:  # ReplicationPad2d(0, pad_r, 0, pad_b)
        x = jnp.pad(x, ((0, 0), (0, pad_b), (0, pad_r), (0, 0)), mode="edge")
    x = swin_block_forward(x, params["wblock"], "W", ws, head_dim)
    x = swin_block_forward(x, params["swblock"], "SW", ws, head_dim)
    x = x[:, :H, :W, :]
    return jnp.transpose(x, (0, 3, 1, 2))


# ------------------------------ pure-JAX reference -----------------------------

def _ln_ref(x, g, b):
    mean = x.mean(-1, keepdims=True)
    var = ((x - mean) ** 2).mean(-1, keepdims=True)
    return (x - mean) / jnp.sqrt(var + LN_EPS) * g + b


def _ref_block(x, p, block_type, ws, head_dim):
    B, H, W, C = x.shape
    NH = C // head_dim
    shift = ws // 2 if block_type == "SW" else 0
    xr = jnp.roll(x, (-shift, -shift), (1, 2)) if shift else x
    hw, ww = H // ws, W // ws
    xw = (xr.reshape(B, hw, ws, ww, ws, C)
            .transpose(0, 1, 3, 2, 4, 5)
            .reshape(B, hw * ww, ws * ws, C))
    xn = _ln_ref(xw, p["ln1_g"], p["ln1_b"])
    qkv = xn @ p["w_qkv"] + p["b_qkv"]
    q, k, v = qkv[..., :C], qkv[..., C:2 * C], qkv[..., 2 * C:]
    split = lambda t: t.reshape(B, hw * ww, ws * ws, NH, head_dim).transpose(3, 0, 1, 2, 4)
    q, k, v = split(q), split(k), split(v)
    sim = jnp.einsum('hbwpc,hbwqc->hbwpq', q, k) * head_dim ** (-0.5)
    sim = sim + relative_embedding(p["rel"], ws)[:, None, None]
    if block_type == "SW":
        sim = sim + make_sw_mask(hw, ww, ws, shift)[None, None]
    probs = jax.nn.softmax(sim, axis=-1)
    out = jnp.einsum('hbwij,hbwjc->hbwic', probs, v)
    out = out.transpose(1, 2, 3, 0, 4).reshape(B, hw * ww, ws * ws, C)
    out = out @ p["w_o"] + p["b_o"]
    out = (out.reshape(B, hw, ww, ws, ws, C)
              .transpose(0, 1, 3, 2, 4, 5)
              .reshape(B, H, W, C))
    if shift:
        out = jnp.roll(out, (shift, shift), (1, 2))
    y = x + out
    yn = _ln_ref(y, p["ln2_g"], p["ln2_b"])
    h = jax.nn.gelu(yn @ p["w1"] + p["b1"], approximate=False)
    return y + (h @ p["w2"] + p["b2"])


def pscf_global_block_ref(x_nchw, params, ws, head_dim):
    B, C, H, W = x_nchw.shape
    pad_b, pad_r = (-H) % ws, (-W) % ws
    x = jnp.transpose(x_nchw, (0, 2, 3, 1))
    if pad_b or pad_r:
        x = jnp.pad(x, ((0, 0), (0, pad_b), (0, pad_r), (0, 0)), mode="edge")
    x = _ref_block(x, params["wblock"], "W", ws, head_dim)
    x = _ref_block(x, params["swblock"], "SW", ws, head_dim)
    x = x[:, :H, :W, :]
    return jnp.transpose(x, (0, 3, 1, 2))


# ------------------------------------ params -----------------------------------

def init_block_params(key, C, NH, ws):
    ks = jax.random.split(key, 8)
    nrm = lambda k, shape: 0.02 * jax.random.normal(k, shape, jnp.float32)
    return {
        "ln1_g": jnp.ones((C,), jnp.float32), "ln1_b": jnp.zeros((C,), jnp.float32),
        "w_qkv": nrm(ks[0], (C, 3 * C)), "b_qkv": nrm(ks[1], (3 * C,)),
        "rel": nrm(ks[2], (NH, 2 * ws - 1, 2 * ws - 1)),
        "w_o": nrm(ks[3], (C, C)), "b_o": nrm(ks[4], (C,)),
        "ln2_g": jnp.ones((C,), jnp.float32), "ln2_b": jnp.zeros((C,), jnp.float32),
        "w1": nrm(ks[5], (C, 4 * C)), "b1": jnp.zeros((4 * C,), jnp.float32),
        "w2": nrm(ks[6], (4 * C, C)), "b2": jnp.zeros((C,), jnp.float32),
    }


if __name__ == "__main__":
    # Small shapes consistent with PSCFGlobalBlock(n_feat=32, head_nc=8, window_size=4)
    B, C, H, W = 2, 32, 8, 8
    head_dim, window_size = 8, 4
    NH = C // head_dim

    key = jax.random.PRNGKey(0)
    kx, kw, ks = jax.random.split(key, 3)
    x = jax.random.normal(kx, (B, C, H, W), jnp.float32)
    params = {
        "wblock": init_block_params(kw, C, NH, window_size),
        "swblock": init_block_params(ks, C, NH, window_size),
    }

    out = pscf_global_block(x, params, window_size, head_dim)
    out = jax.block_until_ready(out)
    assert out.shape == (B, C, H, W)

    ref = jax.block_until_ready(pscf_global_block_ref(x, params, window_size, head_dim))
    np.testing.assert_allclose(np.asarray(out), np.asarray(ref), rtol=1e-3, atol=1e-3)

    print("KERNEL_OK")
</pallas_src>

<mosaic_0001>
module attributes {stable_mosaic.version = 11 : i64} {
  func.func @_swin_block_kernel(%arg0: i32, %arg1: i32, %arg2: memref<1x32x32xf32, #tpu.memory_space<vmem>>, %arg3: memref<1x32xf32, #tpu.memory_space<vmem>>, %arg4: memref<1x32xf32, #tpu.memory_space<vmem>>, %arg5: memref<32x64xf32, #tpu.memory_space<vmem>>, %arg6: memref<1x64xf32, #tpu.memory_space<vmem>>, %arg7: memref<32x128xf32, #tpu.memory_space<vmem>>, %arg8: memref<1x128xf32, #tpu.memory_space<vmem>>, %arg9: memref<1x32xf32, #tpu.memory_space<vmem>>, %arg10: memref<4x16x16xf32, #tpu.memory_space<vmem>>, %arg11: memref<1x32xf32, #tpu.memory_space<vmem>>, %arg12: memref<1x32xf32, #tpu.memory_space<vmem>>, %arg13: memref<32x128xf32, #tpu.memory_space<vmem>>, %arg14: memref<1x128xf32, #tpu.memory_space<vmem>>, %arg15: memref<128x32xf32, #tpu.memory_space<vmem>>, %arg16: memref<1x32xf32, #tpu.memory_space<vmem>>, %arg17: memref<1x32x32xf32, #tpu.memory_space<vmem>>) attributes {dimension_semantics = [#tpu.dimension_semantics<parallel>, #tpu.dimension_semantics<parallel>], iteration_bounds = array<i64: 2, 2>, scalar_prefetch = 0 : i64, scratch_operands = 0 : i64, tpu.core_type = #tpu.core_type<tc>, window_params = [{transform_indices = @transform_0, window_bounds = array<i64: 1, 32, 32>}, {pipeline_mode = #tpu.pipeline_mode<synchronous>, transform_indices = @transform_1, window_bounds = array<i64: 1, 32>}, {pipeline_mode = #tpu.pipeline_mode<synchronous>, transform_indices = @transform_2, window_bounds = array<i64: 1, 32>}, {pipeline_mode = #tpu.pipeline_mode<synchronous>, transform_indices = @transform_3, window_bounds = array<i64: 32, 64>}, {pipeline_mode = #tpu.pipeline_mode<synchronous>, transform_indices = @transform_4, window_bounds = array<i64: 1, 64>}, {pipeline_mode = #tpu.pipeline_mode<synchronous>, transform_indices = @transform_5, window_bounds = array<i64: 32, 128>}, {pipeline_mode = #tpu.pipeline_mode<synchronous>, transform_indices = @transform_6, window_bounds = array<i64: 1, 128>}, {pipeline_mode = #tpu.pipeline_mode<synchronous>, transform_indices = @transform_7, window_bounds = array<i64: 1, 32>}, {pipeline_mode = #tpu.pipeline_mode<synchronous>, transform_indices = @transform_8, window_bounds = array<i64: 4, 16, 16>}, {pipeline_mode = #tpu.pipeline_mode<synchronous>, transform_indices = @transform_9, window_bounds = array<i64: 1, 32>}, {pipeline_mode = #tpu.pipeline_mode<synchronous>, transform_indices = @transform_10, window_bounds = array<i64: 1, 32>}, {pipeline_mode = #tpu.pipeline_mode<synchronous>, transform_indices = @transform_11, window_bounds = array<i64: 32, 128>}, {pipeline_mode = #tpu.pipeline_mode<synchronous>, transform_indices = @transform_12, window_bounds = array<i64: 1, 128>}, {pipeline_mode = #tpu.pipeline_mode<synchronous>, transform_indices = @transform_13, window_bounds = array<i64: 128, 32>}, {pipeline_mode = #tpu.pipeline_mode<synchronous>, transform_indices = @transform_14, window_bounds = array<i64: 1, 32>}, {transform_indices = @transform_15, window_bounds = array<i64: 1, 32, 32>}]} {
    %c0 = arith.constant 0 : index
    %c0_0 = arith.constant 0 : index
    %c0_1 = arith.constant 0 : index
    %0 = vector.load %arg2[%c0, %c0_0, %c0_1] : memref<1x32x32xf32, #tpu.memory_space<vmem>>, vector<1x32x32xf32>
    %1 = vector.shape_cast %0 : vector<1x32x32xf32> to vector<32x32xf32>
    %c0_2 = arith.constant 0 : index
    %c0_3 = arith.constant 0 : index
    %2 = vector.load %arg3[%c0_2, %c0_3] : memref<1x32xf32, #tpu.memory_space<vmem>>, vector<1x32xf32>
    %3 = vector.shape_cast %2 : vector<1x32xf32> to vector<32xf32>
    %c0_4 = arith.constant 0 : index
    %c0_5 = arith.constant 0 : index
    %4 = vector.load %arg4[%c0_4, %c0_5] : memref<1x32xf32, #tpu.memory_space<vmem>>, vector<1x32xf32>
    %5 = vector.shape_cast %4 : vector<1x32xf32> to vector<32xf32>
    %cst = arith.constant dense<0.000000e+00> : vector<32xf32>
    %6 = vector.multi_reduction <add>, %1, %cst [1] : vector<32x32xf32> to vector<32xf32>
    %7 = vector.shape_cast %6 : vector<32xf32> to vector<32x1xf32>
    %cst_6 = arith.constant 3.200000e+01 : f32
    %8 = vector.broadcast %cst_6 : f32 to vector<32x1xf32>
    %9 = arith.divf %7, %8 : vector<32x1xf32>
    %10 = vector.broadcast %9 : vector<32x1xf32> to vector<32x32xf32>
    %11 = arith.subf %1, %10 : vector<32x32xf32>
    %12 = arith.mulf %11, %11 : vector<32x32xf32>
    %cst_7 = arith.constant dense<0.000000e+00> : vector<32xf32>
    %13 = vector.multi_reduction <add>, %12, %cst_7 [1] : vector<32x32xf32> to vector<32xf32>
    %14 = vector.shape_cast %13 : vector<32xf32> to vector<32x1xf32>
    %cst_8 = arith.constant 3.200000e+01 : f32
    %15 = vector.broadcast %cst_8 : f32 to vector<32x1xf32>
    %16 = arith.divf %14, %15 : vector<32x1xf32>
    %17 = vector.broadcast %9 : vector<32x1xf32> to vector<32x32xf32>
    %18 = arith.subf %1, %17 : vector<32x32xf32>
    %cst_9 = arith.constant 9.99999974E-6 : f32
    %19 = vector.broadcast %cst_9 : f32 to vector<32x1xf32>
    %20 = arith.addf %16, %19 : vector<32x1xf32>
    %21 = math.rsqrt %20 : vector<32x1xf32>
    %22 = vector.broadcast %21 : vector<32x1xf32> to vector<32x32xf32>
    %23 = arith.mulf %18, %22 : vector<32x32xf32>
    %24 = vector.shape_cast %3 : vector<32xf32> to vector<1x32xf32>
    %25 = vector.broadcast %24 : vector<1x32xf32> to vector<32x32xf32>
    %26 = arith.mulf %23, %25 : vector<32x32xf32>
    %27 = vector.shape_cast %5 : vector<32xf32> to vector<1x32xf32>
    %28 = vector.broadcast %27 : vector<1x32xf32> to vector<32x32xf32>
    %29 = arith.addf %26, %28 : vector<32x32xf32>
    %c0_10 = arith.constant 0 : index
    %c0_11 = arith.constant 0 : index
    %30 = vector.load %arg5[%c0_10, %c0_11] : memref<32x64xf32, #tpu.memory_space<vmem>>, vector<32x64xf32>
    %cst_12 = arith.constant dense<0.000000e+00> : vector<32x64xf32>
    %31 = tpu.matmul %29, %30, %cst_12 {dimension_numbers = #tpu.dot_dimension_numbers<[1], [0], [0], [1], [0, 0, 1, 1], [], []>} : vector<32x32xf32>, vector<32x64xf32>, vector<32x64xf32> -> vector<32x64xf32>
    %c0_13 = arith.constant 0 : index
    %c0_14 = arith.constant 0 : index
    %32 = vector.load %arg6[%c0_13, %c0_14] : memref<1x64xf32, #tpu.memory_space<vmem>>, vector<1x64xf32>
    %33 = vector.broadcast %32 : vector<1x64xf32> to vector<32x64xf32>
    %34 = arith.addf %31, %33 : vector<32x64xf32>
    %c0_15 = arith.constant 0 : index
    %c0_16 = arith.constant 0 : index
    %35 = vector.load %arg7[%c0_15, %c0_16] : memref<32x128xf32, #tpu.memory_space<vmem>>, vector<32x128xf32>
    %cst_17 = arith.constant dense<0.000000e+00> : vector<32x128xf32>
    %36 = tpu.matmul %29, %35, %cst_17 {dimension_numbers = #tpu.dot_dimension_numbers<[1], [0], [0], [1], [0, 0, 1, 1], [], []>} : vector<32x32xf32>, vector<32x128xf32>, vector<32x128xf32> -> vector<32x128xf32>
    %c0_18 = arith.constant 0 : index
    %c0_19 = arith.constant 0 : index
    %37 = vector.load %arg8[%c0_18, %c0_19] : memref<1x128xf32, #tpu.memory_space<vmem>>, vector<1x128xf32>
    %38 = vector.broadcast %37 : vector<1x128xf32> to vector<32x128xf32>
    %39 = arith.addf %36, %38 : vector<32x128xf32>
    %c0_20 = arith.constant 0 : index
    %c0_21 = arith.constant 0 : index
    %c0_22 = arith.constant 0 : index
    %40 = vector.load %arg10[%c0_20, %c0_21, %c0_22] : memref<4x16x16xf32, #tpu.memory_space<vmem>>, vector<4x16x16xf32>
    %41 = vector.extract_strided_slice %34 {offsets = [0, 0], sizes = [32, 8], strides = [1, 1]} : vector<32x64xf32> to vector<32x8xf32>
    %42 = vector.shape_cast %41 : vector<32x8xf32> to vector<2x16x8xf32>
    %43 = vector.extract_strided_slice %34 {offsets = [0, 8], sizes = [32, 8], strides = [1, 1]} : vector<32x64xf32> to vector<32x8xf32>
    %44 = vector.shape_cast %43 : vector<32x8xf32> to vector<2x16x8xf32>
    %45 = vector.extract_strided_slice %39 {offsets = [0, 0], sizes = [32, 32], strides = [1, 1]} : vector<32x128xf32> to vector<32x32xf32>
    %46 = vector.shape_cast %45 : vector<32x32xf32> to vector<2x16x32xf32>
    "tpu.trace_start"() <{level = 10 : i32, message = "wpd,wqd->wpq"}> : () -> ()
    %cst_23 = arith.constant dense<0.000000e+00> : vector<2x16x16xf32>
    %47 = tpu.matmul %42, %44, %cst_23 {dimension_numbers = #tpu.dot_dimension_numbers<[2], [2], [1], [1], [0, 0, 0, 1, 1, 1], [0], [0]>} : vector<2x16x8xf32>, vector<2x16x8xf32>, vector<2x16x16xf32> -> vector<2x16x16xf32>
    "tpu.trace_stop"() : () -> ()
    %48 = vector.extract_strided_slice %40 {offsets = [0, 0, 0], sizes = [1, 16, 16], strides = [1, 1, 1]} : vector<4x16x16xf32> to vector<1x16x16xf32>
    %49 = vector.shape_cast %48 : vector<1x16x16xf32> to vector<16x16xf32>
    %50 = vector.shape_cast %49 : vector<16x16xf32> to vector<1x16x16xf32>
    %51 = vector.broadcast %50 : vector<1x16x16xf32> to vector<2x16x16xf32>
    %52 = arith.addf %47, %51 : vector<2x16x16xf32>
    %cst_24 = arith.constant dense<0xFF800000> : vector<2x16xf32>
    %53 = vector.multi_reduction <maximumf>, %52, %cst_24 [2] : vector<2x16x16xf32> to vector<2x16xf32>
    %54 = vector.shape_cast %53 : vector<2x16xf32> to vector<2x16x1xf32>
    %55 = vector.broadcast %54 : vector<2x16x1xf32> to vector<2x16x16xf32>
    %56 = arith.subf %52, %55 : vector<2x16x16xf32>
    %57 = math.exp %56 : vector<2x16x16xf32>
    %cst_25 = arith.constant dense<0.000000e+00> : vector<2x16xf32>
    %58 = vector.multi_reduction <add>, %57, %cst_25 [2] : vector<2x16x16xf32> to vector<2x16xf32>
    %59 = vector.shape_cast %58 : vector<2x16xf32> to vector<2x16x1xf32>
    %60 = tpu.reciprocal %59 {approx = true} : vector<2x16x1xf32> -> vector<2x16x1xf32>
    %61 = vector.broadcast %60 : vector<2x16x1xf32> to vector<2x16x16xf32>
    %62 = arith.mulf %57, %61 : vector<2x16x16xf32>
    "tpu.trace_start"() <{level = 10 : i32, message = "wpq,wqc->wpc"}> : () -> ()
    %cst_26 = arith.constant dense<0.000000e+00> : vector<2x16x32xf32>
    %63 = tpu.matmul %62, %46, %cst_26 {dimension_numbers = #tpu.dot_dimension_numbers<[2], [1], [1], [2], [0, 0, 0, 1, 1, 2], [0], [0]>} : vector<2x16x16xf32>, vector<2x16x32xf32>, vector<2x16x32xf32> -> vector<2x16x32xf32>
    "tpu.trace_stop"() : () -> ()
    %64 = vector.shape_cast %63 : vector<2x16x32xf32> to vector<32x32xf32>
    %65 = vector.extract_strided_slice %34 {offsets = [0, 16], sizes = [32, 8], strides = [1, 1]} : vector<32x64xf32> to vector<32x8xf32>
    %66 = vector.shape_cast %65 : vector<32x8xf32> to vector<2x16x8xf32>
    %67 = vector.extract_strided_slice %34 {offsets = [0, 24], sizes = [32, 8], strides = [1, 1]} : vector<32x64xf32> to vector<32x8xf32>
    %68 = vector.shape_cast %67 : vector<32x8xf32> to vector<2x16x8xf32>
    %69 = vector.extract_strided_slice %39 {offsets = [0, 32], sizes = [32, 32], strides = [1, 1]} : vector<32x128xf32> to vector<32x32xf32>
    %70 = vector.shape_cast %69 : vector<32x32xf32> to vector<2x16x32xf32>
    "tpu.trace_start"() <{level = 10 : i32, message = "wpd,wqd->wpq"}> : () -> ()
    %cst_27 = arith.constant dense<0.000000e+00> : vector<2x16x16xf32>
    %71 = tpu.matmul %66, %68, %cst_27 {dimension_numbers = #tpu.dot_dimension_numbers<[2], [2], [1], [1], [0, 0, 0, 1, 1, 1], [0], [0]>} : vector<2x16x8xf32>, vector<2x16x8xf32>, vector<2x16x16xf32> -> vector<2x16x16xf32>
    "tpu.trace_stop"() : () -> ()
    %72 = vector.extract_strided_slice %40 {offsets = [1, 0, 0], sizes = [1, 16, 16], strides = [1, 1, 1]} : vector<4x16x16xf32> to vector<1x16x16xf32>
    %73 = vector.shape_cast %72 : vector<1x16x16xf32> to vector<16x16xf32>
    %74 = vector.shape_cast %73 : vector<16x16xf32> to vector<1x16x16xf32>
    %75 = vector.broadcast %74 : vector<1x16x16xf32> to vector<2x16x16xf32>
    %76 = arith.addf %71, %75 : vector<2x16x16xf32>
    %cst_28 = arith.constant dense<0xFF800000> : vector<2x16xf32>
    %77 = vector.multi_reduction <maximumf>, %76, %cst_28 [2] : vector<2x16x16xf32> to vector<2x16xf32>
    %78 = vector.shape_cast %77 : vector<2x16xf32> to vector<2x16x1xf32>
    %79 = vector.broadcast %78 : vector<2x16x1xf32> to vector<2x16x16xf32>
    %80 = arith.subf %76, %79 : vector<2x16x16xf32>
    %81 = math.exp %80 : vector<2x16x16xf32>
    %cst_29 = arith.constant dense<0.000000e+00> : vector<2x16xf32>
    %82 = vector.multi_reduction <add>, %81, %cst_29 [2] : vector<2x16x16xf32> to vector<2x16xf32>
    %83 = vector.shape_cast %82 : vector<2x16xf32> to vector<2x16x1xf32>
    %84 = tpu.reciprocal %83 {approx = true} : vector<2x16x1xf32> -> vector<2x16x1xf32>
    %85 = vector.broadcast %84 : vector<2x16x1xf32> to vector<2x16x16xf32>
    %86 = arith.mulf %81, %85 : vector<2x16x16xf32>
    "tpu.trace_start"() <{level = 10 : i32, message = "wpq,wqc->wpc"}> : () -> ()
    %cst_30 = arith.constant dense<0.000000e+00> : vector<2x16x32xf32>
    %87 = tpu.matmul %86, %70, %cst_30 {dimension_numbers = #tpu.dot_dimension_numbers<[2], [1], [1], [2], [0, 0, 0, 1, 1, 2], [0], [0]>} : vector<2x16x16xf32>, vector<2x16x32xf32>, vector<2x16x32xf32> -> vector<2x16x32xf32>
    "tpu.trace_stop"() : () -> ()
    %88 = vector.shape_cast %87 : vector<2x16x32xf32> to vector<32x32xf32>
    %89 = arith.addf %64, %88 : vector<32x32xf32>
    %90 = vector.extract_strided_slice %34 {offsets = [0, 32], sizes = [32, 8], strides = [1, 1]} : vector<32x64xf32> to vector<32x8xf32>
    %91 = vector.shape_cast %90 : vector<32x8xf32> to vector<2x16x8xf32>
    %92 = vector.extract_strided_slice %34 {offsets = [0, 40], sizes = [32, 8], strides = [1, 1]} : vector<32x64xf32> to vector<32x8xf32>
    %93 = vector.shape_cast %92 : vector<32x8xf32> to vector<2x16x8xf32>
    %94 = vector.extract_strided_slice %39 {offsets = [0, 64], sizes = [32, 32], strides = [1, 1]} : vector<32x128xf32> to vector<32x32xf32>
    %95 = vector.shape_cast %94 : vector<32x32xf32> to vector<2x16x32xf32>
    "tpu.trace_start"() <{level = 10 : i32, message = "wpd,wqd->wpq"}> : () -> ()
    %cst_31 = arith.constant dense<0.000000e+00> : vector<2x16x16xf32>
    %96 = tpu.matmul %91, %93, %cst_31 {dimension_numbers = #tpu.dot_dimension_numbers<[2], [2], [1], [1], [0, 0, 0, 1, 1, 1], [0], [0]>} : vector<2x16x8xf32>, vector<2x16x8xf32>, vector<2x16x16xf32> -> vector<2x16x16xf32>
    "tpu.trace_stop"() : () -> ()
    %97 = vector.extract_strided_slice %40 {offsets = [2, 0, 0], sizes = [1, 16, 16], strides = [1, 1, 1]} : vector<4x16x16xf32> to vector<1x16x16xf32>
    %98 = vector.shape_cast %97 : vector<1x16x16xf32> to vector<16x16xf32>
    %99 = vector.shape_cast %98 : vector<16x16xf32> to vector<1x16x16xf32>
    %100 = vector.broadcast %99 : vector<1x16x16xf32> to vector<2x16x16xf32>
    %101 = arith.addf %96, %100 : vector<2x16x16xf32>
    %cst_32 = arith.constant dense<0xFF800000> : vector<2x16xf32>
    %102 = vector.multi_reduction <maximumf>, %101, %cst_32 [2] : vector<2x16x16xf32> to vector<2x16xf32>
    %103 = vector.shape_cast %102 : vector<2x16xf32> to vector<2x16x1xf32>
    %104 = vector.broadcast %103 : vector<2x16x1xf32> to vector<2x16x16xf32>
    %105 = arith.subf %101, %104 : vector<2x16x16xf32>
    %106 = math.exp %105 : vector<2x16x16xf32>
    %cst_33 = arith.constant dense<0.000000e+00> : vector<2x16xf32>
    %107 = vector.multi_reduction <add>, %106, %cst_33 [2] : vector<2x16x16xf32> to vector<2x16xf32>
    %108 = vector.shape_cast %107 : vector<2x16xf32> to vector<2x16x1xf32>
    %109 = tpu.reciprocal %108 {approx = true} : vector<2x16x1xf32> -> vector<2x16x1xf32>
    %110 = vector.broadcast %109 : vector<2x16x1xf32> to vector<2x16x16xf32>
    %111 = arith.mulf %106, %110 : vector<2x16x16xf32>
    "tpu.trace_start"() <{level = 10 : i32, message = "wpq,wqc->wpc"}> : () -> ()
    %cst_34 = arith.constant dense<0.000000e+00> : vector<2x16x32xf32>
    %112 = tpu.matmul %111, %95, %cst_34 {dimension_numbers = #tpu.dot_dimension_numbers<[2], [1], [1], [2], [0, 0, 0, 1, 1, 2], [0], [0]>} : vector<2x16x16xf32>, vector<2x16x32xf32>, vector<2x16x32xf32> -> vector<2x16x32xf32>
    "tpu.trace_stop"() : () -> ()
    %113 = vector.shape_cast %112 : vector<2x16x32xf32> to vector<32x32xf32>
    %114 = arith.addf %89, %113 : vector<32x32xf32>
    %115 = vector.extract_strided_slice %34 {offsets = [0, 48], sizes = [32, 8], strides = [1, 1]} : vector<32x64xf32> to vector<32x8xf32>
    %116 = vector.shape_cast %115 : vector<32x8xf32> to vector<2x16x8xf32>
    %117 = vector.extract_strided_slice %34 {offsets = [0, 56], sizes = [32, 8], strides = [1, 1]} : vector<32x64xf32> to vector<32x8xf32>
    %118 = vector.shape_cast %117 : vector<32x8xf32> to vector<2x16x8xf32>
    %119 = vector.extract_strided_slice %39 {offsets = [0, 96], sizes = [32, 32], strides = [1, 1]} : vector<32x128xf32> to vector<32x32xf32>
    %120 = vector.shape_cast %119 : vector<32x32xf32> to vector<2x16x32xf32>
    "tpu.trace_start"() <{level = 10 : i32, message = "wpd,wqd->wpq"}> : () -> ()
    %cst_35 = arith.constant dense<0.000000e+00> : vector<2x16x16xf32>
    %121 = tpu.matmul %116, %118, %cst_35 {dimension_numbers = #tpu.dot_dimension_numbers<[2], [2], [1], [1], [0, 0, 0, 1, 1, 1], [0], [0]>} : vector<2x16x8xf32>, vector<2x16x8xf32>, vector<2x16x16xf32> -> vector<2x16x16xf32>
    "tpu.trace_stop"() : () -> ()
    %122 = vector.extract_strided_slice %40 {offsets = [3, 0, 0], sizes = [1, 16, 16], strides = [1, 1, 1]} : vector<4x16x16xf32> to vector<1x16x16xf32>
    %123 = vector.shape_cast %122 : vector<1x16x16xf32> to vector<16x16xf32>
    %124 = vector.shape_cast %123 : vector<16x16xf32> to vector<1x16x16xf32>
    %125 = vector.broadcast %124 : vector<1x16x16xf32> to vector<2x16x16xf32>
    %126 = arith.addf %121, %125 : vector<2x16x16xf32>
    %cst_36 = arith.constant dense<0xFF800000> : vector<2x16xf32>
    %127 = vector.multi_reduction <maximumf>, %126, %cst_36 [2] : vector<2x16x16xf32> to vector<2x16xf32>
    %128 = vector.shape_cast %127 : vector<2x16xf32> to vector<2x16x1xf32>
    %129 = vector.broadcast %128 : vector<2x16x1xf32> to vector<2x16x16xf32>
    %130 = arith.subf %126, %129 : vector<2x16x16xf32>
    %131 = math.exp %130 : vector<2x16x16xf32>
    %cst_37 = arith.constant dense<0.000000e+00> : vector<2x16xf32>
    %132 = vector.multi_reduction <add>, %131, %cst_37 [2] : vector<2x16x16xf32> to vector<2x16xf32>
    %133 = vector.shape_cast %132 : vector<2x16xf32> to vector<2x16x1xf32>
    %134 = tpu.reciprocal %133 {approx = true} : vector<2x16x1xf32> -> vector<2x16x1xf32>
    %135 = vector.broadcast %134 : vector<2x16x1xf32> to vector<2x16x16xf32>
    %136 = arith.mulf %131, %135 : vector<2x16x16xf32>
    "tpu.trace_start"() <{level = 10 : i32, message = "wpq,wqc->wpc"}> : () -> ()
    %cst_38 = arith.constant dense<0.000000e+00> : vector<2x16x32xf32>
    %137 = tpu.matmul %136, %120, %cst_38 {dimension_numbers = #tpu.dot_dimension_numbers<[2], [1], [1], [2], [0, 0, 0, 1, 1, 2], [0], [0]>} : vector<2x16x16xf32>, vector<2x16x32xf32>, vector<2x16x32xf32> -> vector<2x16x32xf32>
    "tpu.trace_stop"() : () -> ()
    %138 = vector.shape_cast %137 : vector<2x16x32xf32> to vector<32x32xf32>
    %139 = arith.addf %114, %138 : vector<32x32xf32>
    %140 = arith.addf %1, %139 : vector<32x32xf32>
    %c0_39 = arith.constant 0 : index
    %c0_40 = arith.constant 0 : index
    %141 = vector.load %arg9[%c0_39, %c0_40] : memref<1x32xf32, #tpu.memory_space<vmem>>, vector<1x32xf32>
    %142 = vector.shape_cast %141 : vector<1x32xf32> to vector<32xf32>
    %143 = vector.shape_cast %142 : vector<32xf32> to vector<1x32xf32>
    %144 = vector.broadcast %143 : vector<1x32xf32> to vector<32x32xf32>
    %145 = arith.addf %140, %144 : vector<32x32xf32>
    %c0_41 = arith.constant 0 : index
    %c0_42 = arith.constant 0 : index
    %146 = vector.load %arg11[%c0_41, %c0_42] : memref<1x32xf32, #tpu.memory_space<vmem>>, vector<1x32xf32>
    %147 = vector.shape_cast %146 : vector<1x32xf32> to vector<32xf32>
    %c0_43 = arith.constant 0 : index
    %c0_44 = arith.constant 0 : index
    %148 = vector.load %arg12[%c0_43, %c0_44] : memref<1x32xf32, #tpu.memory_space<vmem>>, vector<1x32xf32>
    %149 = vector.shape_cast %148 : vector<1x32xf32> to vector<32xf32>
    %cst_45 = arith.constant dense<0.000000e+00> : vector<32xf32>
    %150 = vector.multi_reduction <add>, %145, %cst_45 [1] : vector<32x32xf32> to vector<32xf32>
    %151 = vector.shape_cast %150 : vector<32xf32> to vector<32x1xf32>
    %cst_46 = arith.constant 3.200000e+01 : f32
    %152 = vector.broadcast %cst_46 : f32 to vector<32x1xf32>
    %153 = arith.divf %151, %152 : vector<32x1xf32>
    %154 = vector.broadcast %153 : vector<32x1xf32> to vector<32x32xf32>
    %155 = arith.subf %145, %154 : vector<32x32xf32>
    %156 = arith.mulf %155, %155 : vector<32x32xf32>
    %cst_47 = arith.constant dense<0.000000e+00> : vector<32xf32>
    %157 = vector.multi_reduction <add>, %156, %cst_47 [1] : vector<32x32xf32> to vector<32xf32>
    %158 = vector.shape_cast %157 : vector<32xf32> to vector<32x1xf32>
    %cst_48 = arith.constant 3.200000e+01 : f32
    %159 = vector.broadcast %cst_48 : f32 to vector<32x1xf32>
    %160 = arith.divf %158, %159 : vector<32x1xf32>
    %161 = vector.broadcast %153 : vector<32x1xf32> to vector<32x32xf32>
    %162 = arith.subf %145, %161 : vector<32x32xf32>
    %cst_49 = arith.constant 9.99999974E-6 : f32
    %163 = vector.broadcast %cst_49 : f32 to vector<32x1xf32>
    %164 = arith.addf %160, %163 : vector<32x1xf32>
    %165 = math.rsqrt %164 : vector<32x1xf32>
    %166 = vector.broadcast %165 : vector<32x1xf32> to vector<32x32xf32>
    %167 = arith.mulf %162, %166 : vector<32x32xf32>
    %168 = vector.shape_cast %147 : vector<32xf32> to vector<1x32xf32>
    %169 = vector.broadcast %168 : vector<1x32xf32> to vector<32x32xf32>
    %170 = arith.mulf %167, %169 : vector<32x32xf32>
    %171 = vector.shape_cast %149 : vector<32xf32> to vector<1x32xf32>
    %172 = vector.broadcast %171 : vector<1x32xf32> to vector<32x32xf32>
    %173 = arith.addf %170, %172 : vector<32x32xf32>
    %c0_50 = arith.constant 0 : index
    %c0_51 = arith.constant 0 : index
    %174 = vector.load %arg13[%c0_50, %c0_51] : memref<32x128xf32, #tpu.memory_space<vmem>>, vector<32x128xf32>
    %cst_52 = arith.constant dense<0.000000e+00> : vector<32x128xf32>
    %175 = tpu.matmul %173, %174, %cst_52 {dimension_numbers = #tpu.dot_dimension_numbers<[1], [0], [0], [1], [0, 0, 1, 1], [], []>} : vector<32x32xf32>, vector<32x128xf32>, vector<32x128xf32> -> vector<32x128xf32>
    %c0_53 = arith.constant 0 : index
    %c0_54 = arith.constant 0 : index
    %176 = vector.load %arg14[%c0_53, %c0_54] : memref<1x128xf32, #tpu.memory_space<vmem>>, vector<1x128xf32>
    %177 = vector.shape_cast %176 : vector<1x128xf32> to vector<128xf32>
    %178 = vector.shape_cast %177 : vector<128xf32> to vector<1x128xf32>
    %179 = vector.broadcast %178 : vector<1x128xf32> to vector<32x128xf32>
    %180 = arith.addf %175, %179 : vector<32x128xf32>
    %cst_55 = arith.constant 5.000000e-01 : f32
    %181 = vector.broadcast %cst_55 : f32 to vector<32x128xf32>
    %182 = arith.mulf %181, %180 : vector<32x128xf32>
    %cst_56 = arith.constant 0.707106769 : f32
    %183 = vector.broadcast %cst_56 : f32 to vector<32x128xf32>
    %184 = arith.mulf %180, %183 : vector<32x128xf32>
    %cst_57 = arith.constant 0.000000e+00 : f32
    %185 = vector.broadcast %cst_57 : f32 to vector<32x128xf32>
    %186 = arith.cmpf oge, %184, %185 : vector<32x128xf32>
    %cst_58 = arith.constant 1.000000e+00 : f32
    %cst_59 = arith.constant -1.000000e+00 : f32
    %187 = vector.broadcast %cst_58 : f32 to vector<32x128xf32>
    %188 = vector.broadcast %cst_59 : f32 to vector<32x128xf32>
    %189 = arith.select %186, %187, %188 : vector<32x128xi1>, vector<32x128xf32>
    %190 = math.absf %184 : vector<32x128xf32>
    %cst_60 = arith.constant 0.327591091 : f32
    %191 = vector.broadcast %cst_60 : f32 to vector<32x128xf32>
    %192 = arith.mulf %191, %190 : vector<32x128xf32>
    %cst_61 = arith.constant 1.000000e+00 : f32
    %193 = vector.broadcast %cst_61 : f32 to vector<32x128xf32>
    %194 = arith.addf %193, %192 : vector<32x128xf32>
    %195 = tpu.reciprocal %194 {approx = true} : vector<32x128xf32> -> vector<32x128xf32>
    %cst_62 = arith.constant 1.06140542 : f32
    %196 = vector.broadcast %cst_62 : f32 to vector<32x128xf32>
    %197 = arith.mulf %195, %196 : vector<32x128xf32>
    %cst_63 = arith.constant -1.45315206 : f32
    %198 = vector.broadcast %cst_63 : f32 to vector<32x128xf32>
    %199 = arith.addf %198, %197 : vector<32x128xf32>
    %200 = arith.mulf %195, %199 : vector<32x128xf32>
    %cst_64 = arith.constant 1.42141378 : f32
    %201 = vector.broadcast %cst_64 : f32 to vector<32x128xf32>
    %202 = arith.addf %201, %200 : vector<32x128xf32>
    %203 = arith.mulf %195, %202 : vector<32x128xf32>
    %cst_65 = arith.constant -0.284496725 : f32
    %204 = vector.broadcast %cst_65 : f32 to vector<32x128xf32>
    %205 = arith.addf %204, %203 : vector<32x128xf32>
    %206 = arith.mulf %195, %205 : vector<32x128xf32>
    %cst_66 = arith.constant 0.254829586 : f32
    %207 = vector.broadcast %cst_66 : f32 to vector<32x128xf32>
    %208 = arith.addf %207, %206 : vector<32x128xf32>
    %209 = arith.mulf %195, %208 : vector<32x128xf32>
    %cst_67 = arith.constant 0.000000e+00 : f32
    %210 = vector.broadcast %cst_67 : f32 to vector<32x128xf32>
    %211 = arith.subf %210, %190 : vector<32x128xf32>
    %212 = arith.mulf %211, %190 : vector<32x128xf32>
    %213 = math.exp %212 : vector<32x128xf32>
    %214 = arith.mulf %209, %213 : vector<32x128xf32>
    %cst_68 = arith.constant 1.000000e+00 : f32
    %215 = vector.broadcast %cst_68 : f32 to vector<32x128xf32>
    %216 = arith.subf %215, %214 : vector<32x128xf32>
    %217 = arith.mulf %189, %216 : vector<32x128xf32>
    %cst_69 = arith.constant 1.000000e+00 : f32
    %218 = vector.broadcast %cst_69 : f32 to vector<32x128xf32>
    %219 = arith.addf %218, %217 : vector<32x128xf32>
    %220 = arith.mulf %182, %219 : vector<32x128xf32>
    %c0_70 = arith.constant 0 : index
    %c0_71 = arith.constant 0 : index
    %221 = vector.load %arg15[%c0_70, %c0_71] : memref<128x32xf32, #tpu.memory_space<vmem>>, vector<128x32xf32>
    %cst_72 = arith.constant dense<0.000000e+00> : vector<32x32xf32>
    %222 = tpu.matmul %220, %221, %cst_72 {dimension_numbers = #tpu.dot_dimension_numbers<[1], [0], [0], [1], [0, 0, 1, 1], [], []>} : vector<32x128xf32>, vector<128x32xf32>, vector<32x32xf32> -> vector<32x32xf32>
    %223 = arith.addf %145, %222 : vector<32x32xf32>
    %c0_73 = arith.constant 0 : index
    %c0_74 = arith.constant 0 : index
    %224 = vector.load %arg16[%c0_73, %c0_74] : memref<1x32xf32, #tpu.memory_space<vmem>>, vector<1x32xf32>
    %225 = vector.shape_cast %224 : vector<1x32xf32> to vector<32xf32>
    %226 = vector.shape_cast %225 : vector<32xf32> to vector<1x32xf32>
    %227 = vector.broadcast %226 : vector<1x32xf32> to vector<32x32xf32>
    %228 = arith.addf %223, %227 : vector<32x32xf32>
    %c0_75 = arith.constant 0 : index
    %c0_76 = arith.constant 0 : index
    %c0_77 = arith.constant 0 : index
    %229 = vector.load %arg17[%c0_75, %c0_76, %c0_77] : memref<1x32x32xf32, #tpu.memory_space<vmem>>, vector<1x32x32xf32>
    %230 = vector.shape_cast %229 : vector<1x32x32xf32> to vector<32x32xf32>
    %231 = vector.shape_cast %228 : vector<32x32xf32> to vector<1x32x32xf32>
    tpu.vector_store %arg17[%c0_75, %c0_76, %c0_77], %231 {strides = array<i32>} : memref<1x32x32xf32, #tpu.memory_space<vmem>>, vector<1x32x32xf32>,
    return
  }
  func.func @transform_0(%arg0: i32, %arg1: i32) -> (i32, i32, i32) {
    %c0_i32 = arith.constant 0 : i32
    %c0_i32_0 = arith.constant 0 : i32
    return %arg0, %arg1, %c0_i32 : i32, i32, i32
  }
  func.func @transform_1(%arg0: i32, %arg1: i32) -> (i32, i32) {
    %c0_i32 = arith.constant 0 : i32
    %c0_i32_0 = arith.constant 0 : i32
    %c0_i32_1 = arith.constant 0 : i32
    return %c0_i32, %c0_i32_0 : i32, i32
  }
  func.func @transform_2(%arg0: i32, %arg1: i32) -> (i32, i32) {
    %c0_i32 = arith.constant 0 : i32
    %c0_i32_0 = arith.constant 0 : i32
    %c0_i32_1 = arith.constant 0 : i32
    return %c0_i32, %c0_i32_0 : i32, i32
  }
  func.func @transform_3(%arg0: i32, %arg1: i32) -> (i32, i32) {
    %c0_i32 = arith.constant 0 : i32
    %c0_i32_0 = arith.constant 0 : i32
    %c0_i32_1 = arith.constant 0 : i32
    return %c0_i32, %c0_i32_0 : i32, i32
  }
  func.func @transform_4(%arg0: i32, %arg1: i32) -> (i32, i32) {
    %c0_i32 = arith.constant 0 : i32
    %c0_i32_0 = arith.constant 0 : i32
    %c0_i32_1 = arith.constant 0 : i32
    return %c0_i32, %c0_i32_0 : i32, i32
  }
  func.func @transform_5(%arg0: i32, %arg1: i32) -> (i32, i32) {
    %c0_i32 = arith.constant 0 : i32
    %c0_i32_0 = arith.constant 0 : i32
    %c0_i32_1 = arith.constant 0 : i32
    return %c0_i32, %c0_i32_0 : i32, i32
  }
  func.func @transform_6(%arg0: i32, %arg1: i32) -> (i32, i32) {
    %c0_i32 = arith.constant 0 : i32
    %c0_i32_0 = arith.constant 0 : i32
    %c0_i32_1 = arith.constant 0 : i32
    return %c0_i32, %c0_i32_0 : i32, i32
  }
  func.func @transform_7(%arg0: i32, %arg1: i32) -> (i32, i32) {
    %c0_i32 = arith.constant 0 : i32
    %c0_i32_0 = arith.constant 0 : i32
    %c0_i32_1 = arith.constant 0 : i32
    return %c0_i32, %c0_i32_0 : i32, i32
  }
  func.func @transform_8(%arg0: i32, %arg1: i32) -> (i32, i32, i32) {
    %c0_i32 = arith.constant 0 : i32
    %c0_i32_0 = arith.constant 0 : i32
    %c0_i32_1 = arith.constant 0 : i32
    %c0_i32_2 = arith.constant 0 : i32
    return %c0_i32, %c0_i32_0, %c0_i32_1 : i32, i32, i32
  }
  func.func @transform_9(%arg0: i32, %arg1: i32) -> (i32, i32) {
    %c0_i32 = arith.constant 0 : i32
    %c0_i32_0 = arith.constant 0 : i32
    %c0_i32_1 = arith.constant 0 : i32
    return %c0_i32, %c0_i32_0 : i32, i32
  }
  func.func @transform_10(%arg0: i32, %arg1: i32) -> (i32, i32) {
    %c0_i32 = arith.constant 0 : i32
    %c0_i32_0 = arith.constant 0 : i32
    %c0_i32_1 = arith.constant 0 : i32
    return %c0_i32, %c0_i32_0 : i32, i32
  }
  func.func @transform_11(%arg0: i32, %arg1: i32) -> (i32, i32) {
    %c0_i32 = arith.constant 0 : i32
    %c0_i32_0 = arith.constant 0 : i32
    %c0_i32_1 = arith.constant 0 : i32
    return %c0_i32, %c0_i32_0 : i32, i32
  }
  func.func @transform_12(%arg0: i32, %arg1: i32) -> (i32, i32) {
    %c0_i32 = arith.constant 0 : i32
    %c0_i32_0 = arith.constant 0 : i32
    %c0_i32_1 = arith.constant 0 : i32
    return %c0_i32, %c0_i32_0 : i32, i32
  }
  func.func @transform_13(%arg0: i32, %arg1: i32) -> (i32, i32) {
    %c0_i32 = arith.constant 0 : i32
    %c0_i32_0 = arith.constant 0 : i32
    %c0_i32_1 = arith.constant 0 : i32
    return %c0_i32, %c0_i32_0 : i32, i32
  }
  func.func @transform_14(%arg0: i32, %arg1: i32) -> (i32, i32) {
    %c0_i32 = arith.constant 0 : i32
    %c0_i32_0 = arith.constant 0 : i32
    %c0_i32_1 = arith.constant 0 : i32
    return %c0_i32, %c0_i32_0 : i32, i32
  }
  func.func @transform_15(%arg0: i32, %arg1: i32) -> (i32, i32, i32) {
    %c0_i32 = arith.constant 0 : i32
    %c0_i32_0 = arith.constant 0 : i32
    return %arg0, %arg1, %c0_i32 : i32, i32, i32
  }
}

</mosaic_0001>

<llo_original>
// kernel: tpu_custom_call.1
$region0: #{tpu_custom_call.1}
  #allocation0 [shape = 'u32[]', space=smem, size = 0x4, offset = 0x4, fixed_abs, tag = 'smem constant byte address 0x4 - core index']
  #allocation1 [shape = 'u32[72,128]{1,0:T(1,128)}', space=vmem, size = 0x9000, scoped, tag = 'internal scratch']
  %s0 = inlined_call_operand.vmem [shape: f32[2,64,32], index: 0, kind: input, shape index: {}]
  %s1 = inlined_call_operand.vmem [shape: f32[1,32], index: 1, kind: input, shape index: {}]
  %s2 = inlined_call_operand.vmem [shape: f32[1,32], index: 2, kind: input, shape index: {}]
  %s3 = inlined_call_operand.vmem [shape: f32[32,64], index: 3, kind: input, shape index: {}]
  %s4 = inlined_call_operand.vmem [shape: f32[1,64], index: 4, kind: input, shape index: {}]
  %s5 = inlined_call_operand.vmem [shape: f32[32,128], index: 5, kind: input, shape index: {}]
  %s6 = inlined_call_operand.vmem [shape: f32[1,128], index: 6, kind: input, shape index: {}]
  %s7 = inlined_call_operand.vmem [shape: f32[1,32], index: 7, kind: input, shape index: {}]
  %s8 = inlined_call_operand.vmem [shape: f32[4,16,16], index: 8, kind: input, shape index: {}]
  %s9 = inlined_call_operand.vmem [shape: f32[1,32], index: 9, kind: input, shape index: {}]
  %s10 = inlined_call_operand.vmem [shape: f32[1,32], index: 10, kind: input, shape index: {}]
  %s11 = inlined_call_operand.vmem [shape: f32[32,128], index: 11, kind: input, shape index: {}]
  %s12 = inlined_call_operand.vmem [shape: f32[1,128], index: 12, kind: input, shape index: {}]
  %s13 = inlined_call_operand.vmem [shape: f32[128,32], index: 13, kind: input, shape index: {}]
  %s14 = inlined_call_operand.vmem [shape: f32[1,32], index: 14, kind: input, shape index: {}]
  %s15 = inlined_call_operand.vmem [shape: f32[2,64,32], index: 15, kind: output, shape index: {}]
  %s16 = sld [smem:[#allocation0]]
  $region93: #{tpu_custom_call.1} parent=0
    _
  %s18 = ssub.s32 1, %s16
  %s19 = scalar_select 0, %s18, %s16
  loop: start=0, step=1, limit=6
  $region2: #{tpu_custom_call.1} parent=0 // loop_pre_header
    _
  $region3: #{tpu_custom_call.1} parent=0 // loop_header
    %s21 = sphi 0, %s25
    %p22 = scmp.ge.s32.totalorder %s21, 6
    %s28 = sphi 0, %s40
    %s29 = sphi 0, %s36
    %s30 = sphi 0, %s28
    %s31 = sphi 0, %s29
    %s32 = sphi 0, %s30
    %s33 = sphi 0, %s31
    %s45 = sphi 0, %s47
    %s48 = sphi 0, %s45
    %s49 = sphi 0, %s48
    %s65 = sphi 0, %s49
    %s69 = sphi 0, %s69
    %s71 = sphi 0, %s69
    %s72 = sphi 0, %s71
    %s86 = sphi 0, %s72
    %s90 = sphi 0, %s90
    %s92 = sphi 0, %s90
    %s93 = sphi 0, %s92
    %s107 = sphi 0, %s93
    %s111 = sphi 0, %s111
    %s113 = sphi 0, %s111
    %s114 = sphi 0, %s113
    %s128 = sphi 0, %s114
    %s132 = sphi 0, %s132
    %s134 = sphi 0, %s132
    %s135 = sphi 0, %s134
    %s149 = sphi 0, %s135
    %s153 = sphi 0, %s153
    %s155 = sphi 0, %s153
    %s156 = sphi 0, %s155
    %s170 = sphi 0, %s156
    %s174 = sphi 0, %s174
    %s176 = sphi 0, %s174
    %s177 = sphi 0, %s176
    %s191 = sphi 0, %s177
    %s195 = sphi 0, %s195
    %s197 = sphi 0, %s195
    %s198 = sphi 0, %s197
    %s212 = sphi 0, %s198
    %s216 = sphi 0, %s216
    %s218 = sphi 0, %s216
    %s219 = sphi 0, %s218
    %s233 = sphi 0, %s219
    %s237 = sphi 0, %s237
    %s239 = sphi 0, %s237
    %s240 = sphi 0, %s239
    %s254 = sphi 0, %s240
    %s258 = sphi 0, %s258
    %s260 = sphi 0, %s258
    %s261 = sphi 0, %s260
    %s275 = sphi 0, %s261
    %s279 = sphi 0, %s279
    %s281 = sphi 0, %s279
    %s282 = sphi 0, %s281
    %s296 = sphi 0, %s282
    %s300 = sphi 0, %s300
    %s302 = sphi 0, %s300
    %s303 = sphi 0, %s302
    %s317 = sphi 0, %s303
    %s321 = sphi 0, %s321
    %s323 = sphi 0, %s321
    %s324 = sphi 0, %s323
    %s338 = sphi 0, %s324
    %s342 = sphi 0, %s342
    %s344 = sphi 0, %s342
    %s345 = sphi 0, %s344
    %s359 = sphi 0, %s345
    %s367 = sphi 0, %s369
    %s370 = sphi 0, %s367
    %s371 = sphi 0, %s370
    %s387 = sphi 0, %s371
  $region4: #{tpu_custom_call.1} parent=0 // loop_header_branch
    %24 = sbr.rel (%p22) target = $region8
  $region5: #{tpu_custom_call.1} parent=0 // loop_body
    %s26 = ssub.s32 %s21, 1
    %s27 = ssub.s32 %s21, 2
    %s34 = sadd.s32 1, %s29
    %p35 = scmp.ge.s32.totalorder %s34, 2
    %s36 = scalar_select %p35, 0, %s34
    %s37 = sadd.s32 1, %s28
    %s38 = scalar_select %p35, %s37, %s28
    %p39 = scmp.ge.s32.totalorder %s38, 2
    %s40 = scalar_select %p39, 0, %s38
    %s41 = ssub.s32 %s28, %s40
    %s42 = ssub.s32 %s29, %s36
    %s43 = sor.u32 %s41, %s42
    %p44 = scmp.eq.s32.totalorder %s43, 0
    %s46 = sadd.s32 %s45, 1
    %s47 = scalar_select %p44, %s45, %s46
    %p50 = pneg %p44
    %p51 = scmp.eq.s32.totalorder %s21, 3
    %p52 = por %p50, %p51
    %p53 = scmp.ne.s32.totalorder %s45, %s48
    %p54 = scmp.eq.s32.totalorder %s21, 0
    %p55 = por %p53, %p54
    %p56 = scmp.ne.s32.totalorder %s45, %s48
    %p57 = scmp.eq.s32.totalorder %s26, 3
    %p58 = por %p56, %p57
    %p59 = scmp.ne.s32.totalorder %s48, %s49
    %p60 = scmp.eq.s32.totalorder %s26, 0
    %p61 = por %p59, %p60
    %p62 = scmp.ne.s32.totalorder %s48, %s49
    %p63 = scmp.eq.s32.totalorder %s27, 3
    %p64 = por %p62, %p63
    %p66 = scmp.ne.s32.totalorder %s49, %s65
    %p67 = scmp.eq.s32.totalorder %s27, 0
    %p68 = por %p66, %p67
    %s70 = sadd.s32 %s69, 1
    %p73 = scmp.eq.s32.totalorder %s21, 3
    %p74 = scmp.ne.s32.totalorder %s69, %s71
    %p75 = scmp.eq.s32.totalorder %s21, 0
    %p76 = por %p74, %p75
    %p77 = scmp.ne.s32.totalorder %s69, %s71
    %p78 = scmp.eq.s32.totalorder %s26, 3
    %p79 = por %p77, %p78
    %p80 = scmp.ne.s32.totalorder %s71, %s72
    %p81 = scmp.eq.s32.totalorder %s26, 0
    %p82 = por %p80, %p81
    %p83 = scmp.ne.s32.totalorder %s71, %s72
    %p84 = scmp.eq.s32.totalorder %s27, 3
    %p85 = por %p83, %p84
    %p87 = scmp.ne.s32.totalorder %s72, %s86
    %p88 = scmp.eq.s32.totalorder %s27, 0
    %p89 = por %p87, %p88
    %s91 = sadd.s32 %s90, 1
    %p94 = scmp.eq.s32.totalorder %s21, 3
    %p95 = scmp.ne.s32.totalorder %s90, %s92
    %p96 = scmp.eq.s32.totalorder %s21, 0
    %p97 = por %p95, %p96
    %p98 = scmp.ne.s32.totalorder %s90, %s92
    %p99 = scmp.eq.s32.totalorder %s26, 3
    %p100 = por %p98, %p99
    %p101 = scmp.ne.s32.totalorder %s92, %s93
    %p102 = scmp.eq.s32.totalorder %s26, 0
    %p103 = por %p101, %p102
    %p104 = scmp.ne.s32.totalorder %s92, %s93
    %p105 = scmp.eq.s32.totalorder %s27, 3
    %p106 = por %p104, %p105
    %p108 = scmp.ne.s32.totalorder %s93, %s107
    %p109 = scmp.eq.s32.totalorder %s27, 0
    %p110 = por %p108, %p109
    %s112 = sadd.s32 %s111, 1
    %p115 = scmp.eq.s32.totalorder %s21, 3
    %p116 = scmp.ne.s32.totalorder %s111, %s113
    %p117 = scmp.eq.s32.totalorder %s21, 0
    %p118 = por %p116, %p117
    %p119 = scmp.ne.s32.totalorder %s111, %s113
    %p120 = scmp.eq.s32.totalorder %s26, 3
    %p121 = por %p119, %p120
    %p122 = scmp.ne.s32.totalorder %s113, %s114
    %p123 = scmp.eq.s32.totalorder %s26, 0
    %p124 = por %p122, %p123
    %p125 = scmp.ne.s32.totalorder %s113, %s114
    %p126 = scmp.eq.s32.totalorder %s27, 3
    %p127 = por %p125, %p126
    %p129 = scmp.ne.s32.totalorder %s114, %s128
    %p130 = scmp.eq.s32.totalorder %s27, 0
    %p131 = por %p129, %p130
    %s133 = sadd.s32 %s132, 1
    %p136 = scmp.eq.s32.totalorder %s21, 3
    %p137 = scmp.ne.s32.totalorder %s132, %s134
    %p138 = scmp.eq.s32.totalorder %s21, 0
    %p139 = por %p137, %p138
    %p140 = scmp.ne.s32.totalorder %s132, %s134
    %p141 = scmp.eq.s32.totalorder %s26, 3
    %p142 = por %p140, %p141
    %p143 = scmp.ne.s32.totalorder %s134, %s135
    %p144 = scmp.eq.s32.totalorder %s26, 0
    %p145 = por %p143, %p144
    %p146 = scmp.ne.s32.totalorder %s134, %s135
    %p147 = scmp.eq.s32.totalorder %s27, 3
    %p148 = por %p146, %p147
    %p150 = scmp.ne.s32.totalorder %s135, %s149
    %p151 = scmp.eq.s32.totalorder %s27, 0
    %p152 = por %p150, %p151
    %s154 = sadd.s32 %s153, 1
    %p157 = scmp.eq.s32.totalorder %s21, 3
    %p158 = scmp.ne.s32.totalorder %s153, %s155
    %p159 = scmp.eq.s32.totalorder %s21, 0
    %p160 = por %p158, %p159
    %p161 = scmp.ne.s32.totalorder %s153, %s155
    %p162 = scmp.eq.s32.totalorder %s26, 3
    %p163 = por %p161, %p162
    %p164 = scmp.ne.s32.totalorder %s155, %s156
    %p165 = scmp.eq.s32.totalorder %s26, 0
    %p166 = por %p164, %p165
    %p167 = scmp.ne.s32.totalorder %s155, %s156
    %p168 = scmp.eq.s32.totalorder %s27, 3
    %p169 = por %p167, %p168
    %p171 = scmp.ne.s32.totalorder %s156, %s170
    %p172 = scmp.eq.s32.totalorder %s27, 0
    %p173 = por %p171, %p172
    %s175 = sadd.s32 %s174, 1
    %p178 = scmp.eq.s32.totalorder %s21, 3
    %p179 = scmp.ne.s32.totalorder %s174, %s176
    %p180 = scmp.eq.s32.totalorder %s21, 0
    %p181 = por %p179, %p180
    %p182 = scmp.ne.s32.totalorder %s174, %s176
    %p183 = scmp.eq.s32.totalorder %s26, 3
    %p184 = por %p182, %p183
    %p185 = scmp.ne.s32.totalorder %s176, %s177
    %p186 = scmp.eq.s32.totalorder %s26, 0
    %p187 = por %p185, %p186
    %p188 = scmp.ne.s32.totalorder %s176, %s177
    %p189 = scmp.eq.s32.totalorder %s27, 3
    %p190 = por %p188, %p189
    %p192 = scmp.ne.s32.totalorder %s177, %s191
    %p193 = scmp.eq.s32.totalorder %s27, 0
    %p194 = por %p192, %p193
    %s196 = sadd.s32 %s195, 1
    %p199 = scmp.eq.s32.totalorder %s21, 3
    %p200 = scmp.ne.s32.totalorder %s195, %s197
    %p201 = scmp.eq.s32.totalorder %s21, 0
    %p202 = por %p200, %p201
    %p203 = scmp.ne.s32.totalorder %s195, %s197
    %p204 = scmp.eq.s32.totalorder %s26, 3
    %p205 = por %p203, %p204
    %p206 = scmp.ne.s32.totalorder %s197, %s198
    %p207 = scmp.eq.s32.totalorder %s26, 0
    %p208 = por %p206, %p207
    %p209 = scmp.ne.s32.totalorder %s197, %s198
    %p210 = scmp.eq.s32.totalorder %s27, 3
    %p211 = por %p209, %p210
    %p213 = scmp.ne.s32.totalorder %s198, %s212
    %p214 = scmp.eq.s32.totalorder %s27, 0
    %p215 = por %p213, %p214
    %s217 = sadd.s32 %s216, 1
    %p220 = scmp.eq.s32.totalorder %s21, 3
    %p221 = scmp.ne.s32.totalorder %s216, %s218
    %p222 = scmp.eq.s32.totalorder %s21, 0
    %p223 = por %p221, %p222
    %p224 = scmp.ne.s32.totalorder %s216, %s218
    %p225 = scmp.eq.s32.totalorder %s26, 3
    %p226 = por %p224, %p225
    %p227 = scmp.ne.s32.totalorder %s218, %s219
    %p228 = scmp.eq.s32.totalorder %s26, 0
    %p229 = por %p227, %p228
    %p230 = scmp.ne.s32.totalorder %s218, %s219
    %p231 = scmp.eq.s32.totalorder %s27, 3
    %p232 = por %p230, %p231
    %p234 = scmp.ne.s32.totalorder %s219, %s233
    %p235 = scmp.eq.s32.totalorder %s27, 0
    %p236 = por %p234, %p235
    %s238 = sadd.s32 %s237, 1
    %p241 = scmp.eq.s32.totalorder %s21, 3
    %p242 = scmp.ne.s32.totalorder %s237, %s239
    %p243 = scmp.eq.s32.totalorder %s21, 0
    %p244 = por %p242, %p243
    %p245 = scmp.ne.s32.totalorder %s237, %s239
    %p246 = scmp.eq.s32.totalorder %s26, 3
    %p247 = por %p245, %p246
    %p248 = scmp.ne.s32.totalorder %s239, %s240
    %p249 = scmp.eq.s32.totalorder %s26, 0
    %p250 = por %p248, %p249
    %p251 = scmp.ne.s32.totalorder %s239, %s240
    %p252 = scmp.eq.s32.totalorder %s27, 3
    %p253 = por %p251, %p252
    %p255 = scmp.ne.s32.totalorder %s240, %s254
    %p256 = scmp.eq.s32.totalorder %s27, 0
    %p257 = por %p255, %p256
    %s259 = sadd.s32 %s258, 1
    %p262 = scmp.eq.s32.totalorder %s21, 3
    %p263 = scmp.ne.s32.totalorder %s258, %s260
    %p264 = scmp.eq.s32.totalorder %s21, 0
    %p265 = por %p263, %p264
    %p266 = scmp.ne.s32.totalorder %s258, %s260
    %p267 = scmp.eq.s32.totalorder %s26, 3
    %p268 = por %p266, %p267
    %p269 = scmp.ne.s32.totalorder %s260, %s261
    %p270 = scmp.eq.s32.totalorder %s26, 0
    %p271 = por %p269, %p270
    %p272 = scmp.ne.s32.totalorder %s260, %s261
    %p273 = scmp.eq.s32.totalorder %s27, 3
    %p274 = por %p272, %p273
    %p276 = scmp.ne.s32.totalorder %s261, %s275
    %p277 = scmp.eq.s32.totalorder %s27, 0
    %p278 = por %p276, %p277
    %s280 = sadd.s32 %s279, 1
    %p283 = scmp.eq.s32.totalorder %s21, 3
    %p284 = scmp.ne.s32.totalorder %s279, %s281
    %p285 = scmp.eq.s32.totalorder %s21, 0
    %p286 = por %p284, %p285
    %p287 = scmp.ne.s32.totalorder %s279, %s281
    %p288 = scmp.eq.s32.totalorder %s26, 3
    %p289 = por %p287, %p288
    %p290 = scmp.ne.s32.totalorder %s281, %s282
    %p291 = scmp.eq.s32.totalorder %s26, 0
    %p292 = por %p290, %p291
    %p293 = scmp.ne.s32.totalorder %s281, %s282
    %p294 = scmp.eq.s32.totalorder %s27, 3
    %p295 = por %p293, %p294
    %p297 = scmp.ne.s32.totalorder %s282, %s296
    %p298 = scmp.eq.s32.totalorder %s27, 0
    %p299 = por %p297, %p298
    %s301 = sadd.s32 %s300, 1
    %p304 = scmp.eq.s32.totalorder %s21, 3
    %p305 = scmp.ne.s32.totalorder %s300, %s302
    %p306 = scmp.eq.s32.totalorder %s21, 0
    %p307 = por %p305, %p306
    %p308 = scmp.ne.s32.totalorder %s300, %s302
    %p309 = scmp.eq.s32.totalorder %s26, 3
    %p310 = por %p308, %p309
    %p311 = scmp.ne.s32.totalorder %s302, %s303
    %p312 = scmp.eq.s32.totalorder %s26, 0
    %p313 = por %p311, %p312
    %p314 = scmp.ne.s32.totalorder %s302, %s303
    %p315 = scmp.eq.s32.totalorder %s27, 3
    %p316 = por %p314, %p315
    %p318 = scmp.ne.s32.totalorder %s303, %s317
    %p319 = scmp.eq.s32.totalorder %s27, 0
    %p320 = por %p318, %p319
    %s322 = sadd.s32 %s321, 1
    %p325 = scmp.eq.s32.totalorder %s21, 3
    %p326 = scmp.ne.s32.totalorder %s321, %s323
    %p327 = scmp.eq.s32.totalorder %s21, 0
    %p328 = por %p326, %p327
    %p329 = scmp.ne.s32.totalorder %s321, %s323
    %p330 = scmp.eq.s32.totalorder %s26, 3
    %p331 = por %p329, %p330
    %p332 = scmp.ne.s32.totalorder %s323, %s324
    %p333 = scmp.eq.s32.totalorder %s26, 0
    %p334 = por %p332, %p333
    %p335 = scmp.ne.s32.totalorder %s323, %s324
    %p336 = scmp.eq.s32.totalorder %s27, 3
    %p337 = por %p335, %p336
    %p339 = scmp.ne.s32.totalorder %s324, %s338
    %p340 = scmp.eq.s32.totalorder %s27, 0
    %p341 = por %p339, %p340
    %s343 = sadd.s32 %s342, 1
    %p346 = scmp.eq.s32.totalorder %s21, 3
    %p347 = scmp.ne.s32.totalorder %s342, %s344
    %p348 = scmp.eq.s32.totalorder %s21, 0
    %p349 = por %p347, %p348
    %p350 = scmp.ne.s32.totalorder %s342, %s344
    %p351 = scmp.eq.s32.totalorder %s26, 3
    %p352 = por %p350, %p351
    %p353 = scmp.ne.s32.totalorder %s344, %s345
    %p354 = scmp.eq.s32.totalorder %s26, 0
    %p355 = por %p353, %p354
    %p356 = scmp.ne.s32.totalorder %s344, %s345
    %p357 = scmp.eq.s32.totalorder %s27, 3
    %p358 = por %p356, %p357
    %p360 = scmp.ne.s32.totalorder %s345, %s359
    %p361 = scmp.eq.s32.totalorder %s27, 0
    %p362 = por %p360, %p361
    %s363 = ssub.s32 %s28, %s40
    %s364 = ssub.s32 %s29, %s36
    %s365 = sor.u32 %s363, %s364
    %p366 = scmp.eq.s32.totalorder %s365, 0
    %s368 = sadd.s32 %s367, 1
    %s369 = scalar_select %p366, %s367, %s368
    %p372 = pneg %p366
    %p373 = scmp.eq.s32.totalorder %s21, 3
    %p374 = por %p372, %p373
    %p375 = scmp.ne.s32.totalorder %s367, %s370
    %p376 = scmp.eq.s32.totalorder %s21, 0
    %p377 = por %p375, %p376
    %p378 = scmp.ne.s32.totalorder %s367, %s370
    %p379 = scmp.eq.s32.totalorder %s26, 3
    %p380 = por %p378, %p379
    %p381 = scmp.ne.s32.totalorder %s370, %s371
    %p382 = scmp.eq.s32.totalorder %s26, 0
    %p383 = por %p381, %p382
    %p384 = scmp.ne.s32.totalorder %s370, %s371
    %p385 = scmp.eq.s32.totalorder %s27, 3
    %p386 = por %p384, %p385
    %p388 = scmp.ne.s32.totalorder %s371, %s387
    %p389 = scmp.eq.s32.totalorder %s27, 0
    %p390 = por %p388, %p389
    %p391 = scmp.le.s32.totalorder 1, %s21
    %p392 = scmp.lt.s32.totalorder %s21, 5
    %p393 = pnand %p391, %p392
    %p394 = pneg %p393
    // Predicated region
    $region9: #{tpu_custom_call.1} parent=5 // pred_check
      _
    $region10: #{tpu_custom_call.1} parent=5 // pred_check_branch
      %396 = sbr.rel (%p393) target = $region12
    $region11: #{tpu_custom_call.1} parent=5 // pred_region
      %s397 = ssub.s32 %s21, 1
      // Predicated region
      $region13: #{tpu_custom_call.1} parent=11 // pred_check
        %p398 = pneg %p82
      $region14: #{tpu_custom_call.1} parent=11 // pred_check_branch
        %400 = sbr.rel (%p398) target = $region16
      $region15: #{tpu_custom_call.1} parent=11 // pred_region
        _
      $region16: #{tpu_custom_call.1} parent=11 // pred_fallthru
        _
      // Predicated region
      $region17: #{tpu_custom_call.1} parent=11 // pred_check
        %p401 = pneg %p103
      $region18: #{tpu_custom_call.1} parent=11 // pred_check_branch
        %403 = sbr.rel (%p401) target = $region20
      $region19: #{tpu_custom_call.1} parent=11 // pred_region
        _
      $region20: #{tpu_custom_call.1} parent=11 // pred_fallthru
        _
      // Predicated region
      $region21: #{tpu_custom_call.1} parent=11 // pred_check
        %p404 = pneg %p124
      $region22: #{tpu_custom_call.1} parent=11 // pred_check_branch
        %406 = sbr.rel (%p404) target = $region24
      $region23: #{tpu_custom_call.1} parent=11 // pred_region
        _
      $region24: #{tpu_custom_call.1} parent=11 // pred_fallthru
        _
      // Predicated region
      $region25: #{tpu_custom_call.1} parent=11 // pred_check
        %p407 = pneg %p145
      $region26: #{tpu_custom_call.1} parent=11 // pred_check_branch
        %409 = sbr.rel (%p407) target = $region28
      $region27: #{tpu_custom_call.1} parent=11 // pred_region
        _
      $region28: #{tpu_custom_call.1} parent=11 // pred_fallthru
        _
      // Predicated region
      $region29: #{tpu_custom_call.1} parent=11 // pred_check
        %p410 = pneg %p166
      $region30: #{tpu_custom_call.1} parent=11 // pred_check_branch
        %412 = sbr.rel (%p410) target = $region32
      $region31: #{tpu_custom_call.1} parent=11 // pred_region
        _
      $region32: #{tpu_custom_call.1} parent=11 // pred_fallthru
        _
      // Predicated region
      $region33: #{tpu_custom_call.1} parent=11 // pred_check
        %p413 = pneg %p187
      $region34: #{tpu_custom_call.1} parent=11 // pred_check_branch
        %415 = sbr.rel (%p413) target = $region36
      $region35: #{tpu_custom_call.1} parent=11 // pred_region
        _
      $region36: #{tpu_custom_call.1} parent=11 // pred_fallthru
        _
      // Predicated region
      $region37: #{tpu_custom_call.1} parent=11 // pred_check
        %p416 = pneg %p208
      $region38: #{tpu_custom_call.1} parent=11 // pred_check_branch
        %418 = sbr.rel (%p416) target = $region40
      $region39: #{tpu_custom_call.1} parent=11 // pred_region
        _
      $region40: #{tpu_custom_call.1} parent=11 // pred_fallthru
        _
      // Predicated region
      $region41: #{tpu_custom_call.1} parent=11 // pred_check
        %p419 = pneg %p229
      $region42: #{tpu_custom_call.1} parent=11 // pred_check_branch
        %421 = sbr.rel (%p419) target = $region44
      $region43: #{tpu_custom_call.1} parent=11 // pred_region
        _
      $region44: #{tpu_custom_call.1} parent=11 // pred_fallthru
        _
      // Predicated region
      $region45: #{tpu_custom_call.1} parent=11 // pred_check
        %p422 = pneg %p250
      $region46: #{tpu_custom_call.1} parent=11 // pred_check_branch
        %424 = sbr.rel (%p422) target = $region48
      $region47: #{tpu_custom_call.1} parent=11 // pred_region
        _
      $region48: #{tpu_custom_call.1} parent=11 // pred_fallthru
        _
      // Predicated region
      $region49: #{tpu_custom_call.1} parent=11 // pred_check
        %p425 = pneg %p271
      $region50: #{tpu_custom_call.1} parent=11 // pred_check_branch
        %427 = sbr.rel (%p425) target = $region52
      $region51: #{tpu_custom_call.1} parent=11 // pred_region
        _
      $region52: #{tpu_custom_call.1} parent=11 // pred_fallthru
        _
      // Predicated region
      $region53: #{tpu_custom_call.1} parent=11 // pred_check
        %p428 = pneg %p292
      $region54: #{tpu_custom_call.1} parent=11 // pred_check_branch
        %430 = sbr.rel (%p428) target = $region56
      $region55: #{tpu_custom_call.1} parent=11 // pred_region
        _
      $region56: #{tpu_custom_call.1} parent=11 // pred_fallthru
        _
      // Predicated region
      $region57: #{tpu_custom_call.1} parent=11 // pred_check
        %p431 = pneg %p313
      $region58: #{tpu_custom_call.1} parent=11 // pred_check_branch
        %433 = sbr.rel (%p431) target = $region60
      $region59: #{tpu_custom_call.1} parent=11 // pred_region
        _
      $region60: #{tpu_custom_call.1} parent=11 // pred_fallthru
        _
      // Predicated region
      $region61: #{tpu_custom_call.1} parent=11 // pred_check
        %p434 = pneg %p334
      $region62: #{tpu_custom_call.1} parent=11 // pred_check_branch
        %436 = sbr.rel (%p434) target = $region64
      $region63: #{tpu_custom_call.1} parent=11 // pred_region
        _
      $region64: #{tpu_custom_call.1} parent=11 // pred_fallthru
        _
      // Predicated region
      $region65: #{tpu_custom_call.1} parent=11 // pred_check
        %p437 = pneg %p355
      $region66: #{tpu_custom_call.1} parent=11 // pred_check_branch
        %439 = sbr.rel (%p437) target = $region68
      $region67: #{tpu_custom_call.1} parent=11 // pred_region
        _
      $region68: #{tpu_custom_call.1} parent=11 // pred_fallthru
        _
    $region12: #{tpu_custom_call.1} parent=5 // pred_fallthru
      _
    %p440 = scmp.lt.s32.totalorder %s21, 4
    // Predicated region
    $region69: #{tpu_custom_call.1} parent=5 // pred_check
      %p441 = pneg %p440
    $region70: #{tpu_custom_call.1} parent=5 // pred_check_branch
      %443 = sbr.rel (%p441) target = $region72
    $region71: #{tpu_custom_call.1} parent=5 // pred_region
      // Predicated region
      $region73: #{tpu_custom_call.1} parent=71 // pred_check
        %p444 = pneg %p55
      $region74: #{tpu_custom_call.1} parent=71 // pred_check_branch
        %446 = sbr.rel (%p444) target = $region76
      $region75: #{tpu_custom_call.1} parent=71 // pred_region
        %s447 = smul.u32 4, %s29
        %p448 = scmp.lt.s32.totalorder %s28, 1
        %s449 = scalar_select %p448, %s28, 1
        %p450 = scmp.lt.s32.totalorder %s447, 7
        %s451 = scalar_select %p450, %s447, 7
        %s452 = smul.addr %s449, 8
        %s453 = sadd.s32 %s451, %s452
        %s454 = smul.addr %s453, 8
        %s455 = scalar_lea.vmem %s0, %s454
        %s456 = smul.u32 4, %s29
      $region76: #{tpu_custom_call.1} parent=71 // pred_fallthru
        _
    $region72: #{tpu_custom_call.1} parent=5 // pred_fallthru
      _
    %p457 = scmp.le.s32.totalorder 1, %s21
    %p458 = scmp.lt.s32.totalorder %s21, 5
    %p459 = pnand %p457, %p458
    %p460 = pneg %p459
    // Predicated region
    $region77: #{tpu_custom_call.1} parent=5 // pred_check
      _
    $region78: #{tpu_custom_call.1} parent=5 // pred_check_branch
      %462 = sbr.rel (%p459) target = $region80
    $region79: #{tpu_custom_call.1} parent=5 // pred_region
      %s463 = ssub.s32 %s21, 1
      %s464 = smul.u32 4, %s31
      %p465 = scmp.lt.s32.totalorder %s30, 1
      %s466 = scalar_select %p465, %s30, 1
      %p467 = scmp.lt.s32.totalorder %s464, 7
      %s468 = scalar_select %p467, %s464, 7
      %s469 = smul.addr %s466, 8
      %s470 = sadd.s32 %s468, %s469
      %s471 = smul.addr %s470, 8
      %s472 = scalar_lea.vmem %s0, %s471
      %p473 = pneg %p61
      %p474 = pneg %p58
      %p475 = pneg %p82
      %p476 = pneg %p79
      %p477 = pneg %p103
      %p478 = pneg %p100
      %p479 = pneg %p124
      %p480 = pneg %p121
      %p481 = pneg %p145
      %p482 = pneg %p142
      %p483 = pneg %p166
      %p484 = pneg %p163
      %p485 = pneg %p187
      %p486 = pneg %p184
      %p487 = pneg %p208
      %p488 = pneg %p205
      %p489 = pneg %p229
      %p490 = pneg %p226
      %p491 = pneg %p250
      %p492 = pneg %p247
      %p493 = pneg %p271
      %p494 = pneg %p268
      %p495 = pneg %p292
      %p496 = pneg %p289
      %p497 = pneg %p313
      %p498 = pneg %p310
      %p499 = pneg %p334
      %p500 = pneg %p331
      %p501 = pneg %p355
      %p502 = pneg %p352
      %p503 = pneg %p383
      %p504 = pneg %p380
      %s505 = smul.u32 4, %s31
      %p506 = scmp.lt.s32.totalorder %s30, 1
      %s507 = scalar_select %p506, %s30, 1
      %p508 = scmp.lt.s32.totalorder %s505, 7
      %s509 = scalar_select %p508, %s505, 7
      %s510 = smul.addr %s507, 8
      %s511 = sadd.s32 %s509, %s510
      %s512 = smul.addr %s511, 8
      %s513 = scalar_lea.vmem %s15, %s512
      %s514 = smul.u32 4, %s31
      %p515 = scmp.lt.s32.totalorder %s30, 1
      %s516 = scalar_select %p515, %s30, 1
      %p517 = scmp.lt.s32.totalorder %s514, 7
      %s518 = scalar_select %p517, %s514, 7
      %s519 = smul.addr %s516, 8
      %s520 = sadd.s32 %s518, %s519
      %s521 = smul.addr %s520, 8
      %s522 = scalar_lea.vmem %s0, %s521
      %s523 = smul.u32 4, %s31
      %s524 = smul.u32 4, %s31
      %p525 = scmp.lt.s32.totalorder %s30, 1
      %s526 = scalar_select %p525, %s30, 1
      %p527 = scmp.lt.s32.totalorder %s524, 7
      %s528 = scalar_select %p527, %s524, 7
      %s529 = smul.addr %s526, 8
      %s530 = sadd.s32 %s528, %s529
      %s531 = smul.addr %s530, 8
      %s532 = scalar_lea.vmem %s15, %s531
      %s533 = smul.u32 4, %s31
      %v534 = vld [vmem:[%s522] sm:$0xff]
      %v535 = vld [vmem:[%s522 + $0x8] sm:$0xff]
      %v536 = vld [vmem:[%s522 + $0x10] sm:$0xff]
      %v537 = vld [vmem:[%s522 + $0x18] sm:$0xff]
      %v538 = vld [vmem:[%s1] sm:$0x1]
      %v539 = vld [vmem:[%s2] sm:$0x1]
      %vm540 = vcmask 261120
      %v541 = vsel %vm540, %v534, 0.0
      %542 = vadd.xlane.f32.xlu0 %v541
      %v543 = vpop.xlane.xlu0 %542
      %v544 = vsel %vm540, %v535, 0.0
      %545 = vadd.xlane.f32.xlu0 %v544
      %v546 = vpop.xlane.xlu0 %545
      %v547 = vsel %vm540, %v536, 0.0
      %548 = vadd.xlane.f32.xlu0 %v547
      %v549 = vpop.xlane.xlu0 %548
      %v550 = vsel %vm540, %v537, 0.0
      %551 = vadd.xlane.f32.xlu0 %v550
      %v552 = vpop.xlane.xlu0 %551
      %v553 = vrcp.pop 32.0
      %v554 = vmul.f32 32.0, %v553
      %v555 = vsub.f32 1.0, %v554
      %v556 = vmul.f32 %v553, %v555
      %v557 = vadd.f32 %v553, %v556
      %vm558 = vweird.f32 %v553
      %v559 = vsel %vm558, %v553, %v557
      %v560 = vmul.f32 %v543, %v559
      %v561 = vmul.f32 %v546, %v559
      %v562 = vmul.f32 %v549, %v559
      %v563 = vmul.f32 %v552, %v559
      %v564 = vsub.f32 %v534, %v560
      %v565 = vsub.f32 %v535, %v561
      %v566 = vsub.f32 %v536, %v562
      %v567 = vsub.f32 %v537, %v563
      %v568 = vmul.f32 %v564, %v564
      %v569 = vmul.f32 %v565, %v565
      %v570 = vmul.f32 %v566, %v566
      %v571 = vmul.f32 %v567, %v567
      %v572 = vsel %vm540, %v568, 0.0
      %573 = vadd.xlane.f32.xlu0 %v572
      %v574 = vpop.xlane.xlu0 %573
      %v575 = vsel %vm540, %v569, 0.0
      %576 = vadd.xlane.f32.xlu0 %v575
      %v577 = vpop.xlane.xlu0 %576
      %v578 = vsel %vm540, %v570, 0.0
      %579 = vadd.xlane.f32.xlu0 %v578
      %v580 = vpop.xlane.xlu0 %579
      %v581 = vsel %vm540, %v571, 0.0
      %582 = vadd.xlane.f32.xlu0 %v581
      %v583 = vpop.xlane.xlu0 %582
      %v584 = vmul.f32 %v574, %v559
      %v585 = vmul.f32 %v577, %v559
      %v586 = vmul.f32 %v580, %v559
      %v587 = vmul.f32 %v583, %v559
      %v588 = vadd.f32 %v584, 1e-05
      %v589 = vadd.f32 %v585, 1e-05
      %v590 = vadd.f32 %v586, 1e-05
      %v591 = vadd.f32 %v587, 1e-05
      %v592 = vrsqrt.pop %v588
      %v593 = vmul.f32 %v592, %v588
      %v594 = vmul.f32 %v593, %v592
      %v595 = vmul.f32 0.5, %v594
      %v596 = vsub.f32 1.5, %v595
      %v597 = vmul.f32 %v592, %v596
      %vm598 = vweird.f32 %v588
      %vm599 = vweird.f32 %v592
      %vm600 = vmor %vm598, %vm599
      %v601 = vsel %vm600, %v592, %v597
      %v602 = vrsqrt.pop %v589
      %v603 = vmul.f32 %v602, %v589
      %v604 = vmul.f32 %v603, %v602
      %v605 = vmul.f32 0.5, %v604
      %v606 = vsub.f32 1.5, %v605
      %v607 = vmul.f32 %v602, %v606
      %vm608 = vweird.f32 %v589
      %vm609 = vweird.f32 %v602
      %vm610 = vmor %vm608, %vm609
      %v611 = vsel %vm610, %v602, %v607
      %v612 = vrsqrt.pop %v590
      %v613 = vmul.f32 %v612, %v590
      %v614 = vmul.f32 %v613, %v612
      %v615 = vmul.f32 0.5, %v614
      %v616 = vsub.f32 1.5, %v615
      %v617 = vmul.f32 %v612, %v616
      %vm618 = vweird.f32 %v590
      %vm619 = vweird.f32 %v612
      %vm620 = vmor %vm618, %vm619
      %v621 = vsel %vm620, %v612, %v617
      %v622 = vrsqrt.pop %v591
      %v623 = vmul.f32 %v622, %v591
      %v624 = vmul.f32 %v623, %v622
      %v625 = vmul.f32 0.5, %v624
      %v626 = vsub.f32 1.5, %v625
      %v627 = vmul.f32 %v622, %v626
      %vm628 = vweird.f32 %v591
      %vm629 = vweird.f32 %v622
      %vm630 = vmor %vm628, %vm629
      %v631 = vsel %vm630, %v622, %v627
      %v632 = vmul.f32 %v564, %v601
      %v633 = vmul.f32 %v565, %v611
      %v634 = vmul.f32 %v566, %v621
      %v635 = vmul.f32 %v567, %v631
      %v637 = vperm.slane %v538, 0
      %v639 = vmul.f32 %v632, %v637
      %v640 = vmul.f32 %v633, %v637
      %v641 = vmul.f32 %v634, %v637
      %v642 = vmul.f32 %v635, %v637
      %v644 = vperm.slane %v539, 0
      %v646 = vadd.f32 %v639, %v644
      %v647 = vadd.f32 %v640, %v644
      %v648 = vadd.f32 %v641, %v644
      %v649 = vadd.f32 %v642, %v644
      %v650 = vld [vmem:[%s3] sm:$0xff]
      %v651 = vld [vmem:[%s3 + $0x8] sm:$0xff]
      %v652 = vld [vmem:[%s3 + $0x10] sm:$0xff]
      %v653 = vld [vmem:[%s3 + $0x18] sm:$0xff]
      %v654 = vld [vmem:[%s4] sm:$0x1]
      %v656 = vperm.slane %v654, 0
      %v659 = vsel %vm540, %v646, 0
      %v662 = vsel %vm540, %v647, 0
      %v665 = vsel %vm540, %v648, 0
      %v668 = vsel %vm540, %v649, 0
      %670 = vmatpush.msra.mxu0 0.0
      %671 = vmatpush.msra.mxu0 0.0
      %672 = vmatpush.msra.mxu0 0.0
      %673 = vmatpush.msra.mxu0 0.0
      %674 = vmatpush.msra.mxu0 0.0
      %675 = vmatpush.msra.mxu0 0.0
      %676 = vmatpush.msra.mxu0 0.0
      %677 = vmatpush.msra.mxu0 0.0
      %678 = vmatpush.msra.mxu0 0.0
      %679 = vmatpush.msra.mxu0 0.0
      %680 = vmatpush.msra.mxu0 0.0
      %681 = vmatpush.msra.mxu0 0.0
      %682 = vmatpush.msra.mxu0 %v653
      %683 = vmatpush.msra.mxu0 %v652
      %684 = vmatpush.msra.mxu0 %v651
      %685 = vmatpush.msra.mxu0 %v650
      %686 = vmatmul.f32.gmra.mxu0 %v659
      %v687 = vpop.f32.mrf.mxu0
      %v688 = vadd.f32 %v656, %v687
      %689 = vmatmul.f32.gmra.mxu0 %v662
      %v690 = vpop.f32.mrf.mxu0
      %v691 = vadd.f32 %v656, %v690
      %692 = vmatmul.f32.gmra.mxu0 %v665
      %v693 = vpop.f32.mrf.mxu0
      %v694 = vadd.f32 %v656, %v693
      %695 = vmatmul.f32.gmra.mxu0 %v668
      %v696 = vpop.f32.mrf.mxu0
      %v697 = vadd.f32 %v656, %v696
      %698 = vdwg.mxu0
      %v699 = vld [vmem:[%s5] sm:$0xff]
      %v700 = vld [vmem:[%s5 + $0x8] sm:$0xff]
      %v701 = vld [vmem:[%s5 + $0x10] sm:$0xff]
      %v702 = vld [vmem:[%s5 + $0x18] sm:$0xff]
      %v703 = vld [vmem:[%s6] sm:$0x1]
      %v705 = vperm.slane %v703, 0
      %707 = vmatpush.msra.mxu0 0.0
      %708 = vmatpush.msra.mxu0 0.0
      %709 = vmatpush.msra.mxu0 0.0
      %710 = vmatpush.msra.mxu0 0.0
      %711 = vmatpush.msra.mxu0 0.0
      %712 = vmatpush.msra.mxu0 0.0
      %713 = vmatpush.msra.mxu0 0.0
      %714 = vmatpush.msra.mxu0 0.0
      %715 = vmatpush.msra.mxu0 0.0
      %716 = vmatpush.msra.mxu0 0.0
      %717 = vmatpush.msra.mxu0 0.0
      %718 = vmatpush.msra.mxu0 0.0
      %719 = vmatpush.msra.mxu0 %v702
      %720 = vmatpush.msra.mxu0 %v701
      %721 = vmatpush.msra.mxu0 %v700
      %722 = vmatpush.msra.mxu0 %v699
      %723 = vmatmul.f32.gmra.mxu0 %v659
      %v724 = vpop.f32.mrf.mxu0
      %v725 = vadd.f32 %v705, %v724
      %726 = vmatmul.f32.gmra.mxu0 %v662
      %v727 = vpop.f32.mrf.mxu0
      %v728 = vadd.f32 %v705, %v727
      %729 = vmatmul.f32.gmra.mxu0 %v665
      %v730 = vpop.f32.mrf.mxu0
      %v731 = vadd.f32 %v705, %v730
      %732 = vmatmul.f32.gmra.mxu0 %v668
      %v733 = vpop.f32.mrf.mxu0
      %v734 = vadd.f32 %v705, %v733
      %735 = vdwg.mxu0
      %v736 = vld [vmem:[%s8] sm:$0xff]
      %v737 = vld [vmem:[%s8 + $0x8] sm:$0xff]
      %v738 = vld [vmem:[%s8 + $0x10] sm:$0xff]
      %v739 = vld [vmem:[%s8 + $0x18] sm:$0xff]
      %v740 = vld [vmem:[%s8 + $0x20] sm:$0xff]
      %v741 = vld [vmem:[%s8 + $0x28] sm:$0xff]
      %v742 = vld [vmem:[%s8 + $0x30] sm:$0xff]
      %v743 = vld [vmem:[%s8 + $0x38] sm:$0xff]
      %746 = vrot.lane.b32.xlu0 %v688, 120
      %v747 = vpop.permute.xlu0 %746
      %748 = vrot.lane.b32.xlu0 %v691, 120
      %v749 = vpop.permute.xlu0 %748
      %vm750 = vcmask 64512
      %v751 = vsel %vm750, %v688, 0
      %v753 = vsel %vm750, %v691, 0
      %v755 = vsel %vm750, %v747, 0
      %v757 = vsel %vm750, %v749, 0
      %759 = vmatpush.xpose.msra.mxu0 0.0
      %760 = vmatpush.xpose.msra.mxu0 0.0
      %761 = vmatpush.xpose.msra.mxu0 0.0
      %762 = vmatpush.xpose.msra.mxu0 0.0
      %763 = vmatpush.xpose.msra.mxu0 0.0
      %764 = vmatpush.xpose.msra.mxu0 0.0
      %765 = vmatpush.xpose.msra.mxu0 0.0
      %766 = vmatpush.xpose.msra.mxu0 0.0
      %767 = vmatpush.xpose.msra.mxu0 0.0
      %768 = vmatpush.xpose.msra.mxu0 0.0
      %769 = vmatpush.xpose.msra.mxu0 0.0
      %770 = vmatpush.xpose.msra.mxu0 0.0
      %771 = vmatpush.xpose.msra.mxu0 0.0
      %772 = vmatpush.xpose.msra.mxu0 0.0
      %773 = vmatpush.xpose.msra.mxu0 %v757
      %774 = vmatpush.xpose.msra.mxu0 %v755
      %775 = vmatmul.f32.gmra.mxu0 %v751
      %v776 = vpop.f32.mrf.mxu0
      %v777 = vadd.f32 %v736, %v776
      %778 = vmatmul.f32.gmra.mxu0 %v753
      %v779 = vpop.f32.mrf.mxu0
      %v780 = vadd.f32 %v737, %v779
      %781 = vdwg.mxu0
      %784 = vrot.lane.b32.xlu0 %v694, 120
      %v785 = vpop.permute.xlu0 %784
      %786 = vrot.lane.b32.xlu0 %v697, 120
      %v787 = vpop.permute.xlu0 %786
      %v788 = vsel %vm750, %v694, 0
      %v790 = vsel %vm750, %v697, 0
      %v792 = vsel %vm750, %v785, 0
      %v794 = vsel %vm750, %v787, 0
      %796 = vmatpush.xpose.msra.mxu0 0.0
      %797 = vmatpush.xpose.msra.mxu0 0.0
      %798 = vmatpush.xpose.msra.mxu0 0.0
      %799 = vmatpush.xpose.msra.mxu0 0.0
      %800 = vmatpush.xpose.msra.mxu0 0.0
      %801 = vmatpush.xpose.msra.mxu0 0.0
      %802 = vmatpush.xpose.msra.mxu0 0.0
      %803 = vmatpush.xpose.msra.mxu0 0.0
      %804 = vmatpush.xpose.msra.mxu0 0.0
      %805 = vmatpush.xpose.msra.mxu0 0.0
      %806 = vmatpush.xpose.msra.mxu0 0.0
      %807 = vmatpush.xpose.msra.mxu0 0.0
      %808 = vmatpush.xpose.msra.mxu0 0.0
      %809 = vmatpush.xpose.msra.mxu0 0.0
      %810 = vmatpush.xpose.msra.mxu0 %v794
      %811 = vmatpush.xpose.msra.mxu0 %v792
      %812 = vmatmul.f32.gmra.mxu0 %v788
      %v813 = vpop.f32.mrf.mxu0
      %v814 = vadd.f32 %v736, %v813
      %815 = vmatmul.f32.gmra.mxu0 %v790
      %v816 = vpop.f32.mrf.mxu0
      %v817 = vadd.f32 %v737, %v816
      %818 = vdwg.mxu0
      %vm819 = vcmask 130048
      %v820 = vsel %vm819, %v777, -inf
      %821 = vmax.xlane.f32.xlu0 %v820
      %v822 = vpop.xlane.xlu0 %821
      %v823 = vsel %vm819, %v780, -inf
      %824 = vmax.xlane.f32.xlu0 %v823
      %v825 = vpop.xlane.xlu0 %824
      %v826 = vsel %vm819, %v814, -inf
      %827 = vmax.xlane.f32.xlu0 %v826
      %v828 = vpop.xlane.xlu0 %827
      %v829 = vsel %vm819, %v817, -inf
      %830 = vmax.xlane.f32.xlu0 %v829
      %v831 = vpop.xlane.xlu0 %830
      %v832 = vsub.f32 %v777, %v822
      %v833 = vsub.f32 %v780, %v825
      %v834 = vsub.f32 %v814, %v828
      %v835 = vsub.f32 %v817, %v831
      %v836 = vmul.f32 %v832, 1.442695
      %v837 = vpow.pop %v836
      %v838 = vmul.f32 %v833, 1.442695
      %v839 = vpow.pop %v838
      %v840 = vmul.f32 %v834, 1.442695
      %v841 = vpow.pop %v840
      %v842 = vmul.f32 %v835, 1.442695
      %v843 = vpow.pop %v842
      %v844 = vsel %vm819, %v837, 0.0
      %845 = vadd.xlane.f32.xlu0 %v844
      %v846 = vpop.xlane.xlu0 %845
      %v847 = vsel %vm819, %v839, 0.0
      %848 = vadd.xlane.f32.xlu0 %v847
      %v849 = vpop.xlane.xlu0 %848
      %v850 = vsel %vm819, %v841, 0.0
      %851 = vadd.xlane.f32.xlu0 %v850
      %v852 = vpop.xlane.xlu0 %851
      %v853 = vsel %vm819, %v843, 0.0
      %854 = vadd.xlane.f32.xlu0 %v853
      %v855 = vpop.xlane.xlu0 %854
      %v856 = vrcp.pop %v846
      %v857 = vrcp.pop %v849
      %v858 = vrcp.pop %v852
      %v859 = vrcp.pop %v855
      %v860 = vmul.f32 %v837, %v856
      %v861 = vmul.f32 %v839, %v857
      %v862 = vmul.f32 %v841, %v858
      %v863 = vmul.f32 %v843, %v859
      %v865 = vsel %vm819, %v860, 0
      %v868 = vsel %vm819, %v861, 0
      %870 = vmatpush.msra.mxu0 0.0
      %871 = vmatpush.msra.mxu0 0.0
      %872 = vmatpush.msra.mxu0 0.0
      %873 = vmatpush.msra.mxu0 0.0
      %874 = vmatpush.msra.mxu0 0.0
      %875 = vmatpush.msra.mxu0 0.0
      %876 = vmatpush.msra.mxu0 0.0
      %877 = vmatpush.msra.mxu0 0.0
      %878 = vmatpush.msra.mxu0 0.0
      %879 = vmatpush.msra.mxu0 0.0
      %880 = vmatpush.msra.mxu0 0.0
      %881 = vmatpush.msra.mxu0 0.0
      %882 = vmatpush.msra.mxu0 0.0
      %883 = vmatpush.msra.mxu0 0.0
      %884 = vmatpush.msra.mxu0 %v728
      %885 = vmatpush.msra.mxu0 %v725
      %886 = vmatmul.f32.gmra.mxu0 %v865
      %v887 = vpop.f32.mrf.mxu0
      %v888 = vadd.f32 0.0, %v887
      %889 = vmatmul.f32.gmra.mxu0 %v868
      %v890 = vpop.f32.mrf.mxu0
      %v891 = vadd.f32 0.0, %v890
      %892 = vdwg.mxu0
      %v894 = vsel %vm819, %v862, 0
      %v897 = vsel %vm819, %v863, 0
      %899 = vmatpush.msra.mxu0 0.0
      %900 = vmatpush.msra.mxu0 0.0
      %901 = vmatpush.msra.mxu0 0.0
      %902 = vmatpush.msra.mxu0 0.0
      %903 = vmatpush.msra.mxu0 0.0
      %904 = vmatpush.msra.mxu0 0.0
      %905 = vmatpush.msra.mxu0 0.0
      %906 = vmatpush.msra.mxu0 0.0
      %907 = vmatpush.msra.mxu0 0.0
      %908 = vmatpush.msra.mxu0 0.0
      %909 = vmatpush.msra.mxu0 0.0
      %910 = vmatpush.msra.mxu0 0.0
      %911 = vmatpush.msra.mxu0 0.0
      %912 = vmatpush.msra.mxu0 0.0
      %913 = vmatpush.msra.mxu0 %v734
      %914 = vmatpush.msra.mxu0 %v731
      %915 = vmatmul.f32.gmra.mxu0 %v894
      %v916 = vpop.f32.mrf.mxu0
      %v917 = vadd.f32 0.0, %v916
      %918 = vmatmul.f32.gmra.mxu0 %v897
      %v919 = vpop.f32.mrf.mxu0
      %v920 = vadd.f32 0.0, %v919
      %921 = vdwg.mxu0
      %922 = vrot.lane.b32.xlu0 %v688, 112
      %v923 = vpop.permute.xlu0 %922
      %924 = vrot.lane.b32.xlu0 %v691, 112
      %v925 = vpop.permute.xlu0 %924
      %926 = vrot.lane.b32.xlu0 %v688, 104
      %v927 = vpop.permute.xlu0 %926
      %928 = vrot.lane.b32.xlu0 %v691, 104
      %v929 = vpop.permute.xlu0 %928
      %v930 = vsel %vm750, %v923, 0
      %v932 = vsel %vm750, %v925, 0
      %v934 = vsel %vm750, %v927, 0
      %v936 = vsel %vm750, %v929, 0
      %938 = vmatpush.xpose.msra.mxu0 0.0
      %939 = vmatpush.xpose.msra.mxu0 0.0
      %940 = vmatpush.xpose.msra.mxu0 0.0
      %941 = vmatpush.xpose.msra.mxu0 0.0
      %942 = vmatpush.xpose.msra.mxu0 0.0
      %943 = vmatpush.xpose.msra.mxu0 0.0
      %944 = vmatpush.xpose.msra.mxu0 0.0
      %945 = vmatpush.xpose.msra.mxu0 0.0
      %946 = vmatpush.xpose.msra.mxu0 0.0
      %947 = vmatpush.xpose.msra.mxu0 0.0
      %948 = vmatpush.xpose.msra.mxu0 0.0
      %949 = vmatpush.xpose.msra.mxu0 0.0
      %950 = vmatpush.xpose.msra.mxu0 0.0
      %951 = vmatpush.xpose.msra.mxu0 0.0
      %952 = vmatpush.xpose.msra.mxu0 %v936
      %953 = vmatpush.xpose.msra.mxu0 %v934
      %954 = vmatmul.f32.gmra.mxu0 %v930
      %v955 = vpop.f32.mrf.mxu0
      %v956 = vadd.f32 %v738, %v955
      %957 = vmatmul.f32.gmra.mxu0 %v932
      %v958 = vpop.f32.mrf.mxu0
      %v959 = vadd.f32 %v739, %v958
      %960 = vdwg.mxu0
      %961 = vrot.lane.b32.xlu0 %v694, 112
      %v962 = vpop.permute.xlu0 %961
      %963 = vrot.lane.b32.xlu0 %v697, 112
      %v964 = vpop.permute.xlu0 %963
      %965 = vrot.lane.b32.xlu0 %v694, 104
      %v966 = vpop.permute.xlu0 %965
      %967 = vrot.lane.b32.xlu0 %v697, 104
      %v968 = vpop.permute.xlu0 %967
      %v969 = vsel %vm750, %v962, 0
      %v971 = vsel %vm750, %v964, 0
      %v973 = vsel %vm750, %v966, 0
      %v975 = vsel %vm750, %v968, 0
      %977 = vmatpush.xpose.msra.mxu0 0.0
      %978 = vmatpush.xpose.msra.mxu0 0.0
      %979 = vmatpush.xpose.msra.mxu0 0.0
      %980 = vmatpush.xpose.msra.mxu0 0.0
      %981 = vmatpush.xpose.msra.mxu0 0.0
      %982 = vmatpush.xpose.msra.mxu0 0.0
      %983 = vmatpush.xpose.msra.mxu0 0.0
      %984 = vmatpush.xpose.msra.mxu0 0.0
      %985 = vmatpush.xpose.msra.mxu0 0.0
      %986 = vmatpush.xpose.msra.mxu0 0.0
      %987 = vmatpush.xpose.msra.mxu0 0.0
      %988 = vmatpush.xpose.msra.mxu0 0.0
      %989 = vmatpush.xpose.msra.mxu0 0.0
      %990 = vmatpush.xpose.msra.mxu0 0.0
      %991 = vmatpush.xpose.msra.mxu0 %v975
      %992 = vmatpush.xpose.msra.mxu0 %v973
      %993 = vmatmul.f32.gmra.mxu0 %v969
      %v994 = vpop.f32.mrf.mxu0
      %v995 = vadd.f32 %v738, %v994
      %996 = vmatmul.f32.gmra.mxu0 %v971
      %v997 = vpop.f32.mrf.mxu0
      %v998 = vadd.f32 %v739, %v997
      %999 = vdwg.mxu0
      %v1000 = vsel %vm819, %v956, -inf
      %1001 = vmax.xlane.f32.xlu0 %v1000
      %v1002 = vpop.xlane.xlu0 %1001
      %v1003 = vsel %vm819, %v959, -inf
      %1004 = vmax.xlane.f32.xlu0 %v1003
      %v1005 = vpop.xlane.xlu0 %1004
      %v1006 = vsel %vm819, %v995, -inf
      %1007 = vmax.xlane.f32.xlu0 %v1006
      %v1008 = vpop.xlane.xlu0 %1007
      %v1009 = vsel %vm819, %v998, -inf
      %1010 = vmax.xlane.f32.xlu0 %v1009
      %v1011 = vpop.xlane.xlu0 %1010
      %v1012 = vsub.f32 %v956, %v1002
      %v1013 = vsub.f32 %v959, %v1005
      %v1014 = vsub.f32 %v995, %v1008
      %v1015 = vsub.f32 %v998, %v1011
      %v1016 = vmul.f32 %v1012, 1.442695
      %v1017 = vpow.pop %v1016
      %v1018 = vmul.f32 %v1013, 1.442695
      %v1019 = vpow.pop %v1018
      %v1020 = vmul.f32 %v1014, 1.442695
      %v1021 = vpow.pop %v1020
      %v1022 = vmul.f32 %v1015, 1.442695
      %v1023 = vpow.pop %v1022
      %v1024 = vsel %vm819, %v1017, 0.0
      %1025 = vadd.xlane.f32.xlu0 %v1024
      %v1026 = vpop.xlane.xlu0 %1025
      %v1027 = vsel %vm819, %v1019, 0.0
      %1028 = vadd.xlane.f32.xlu0 %v1027
      %v1029 = vpop.xlane.xlu0 %1028
      %v1030 = vsel %vm819, %v1021, 0.0
      %1031 = vadd.xlane.f32.xlu0 %v1030
      %v1032 = vpop.xlane.xlu0 %1031
      %v1033 = vsel %vm819, %v1023, 0.0
      %1034 = vadd.xlane.f32.xlu0 %v1033
      %v1035 = vpop.xlane.xlu0 %1034
      %v1036 = vrcp.pop %v1026
      %v1037 = vrcp.pop %v1029
      %v1038 = vrcp.pop %v1032
      %v1039 = vrcp.pop %v1035
      %v1040 = vmul.f32 %v1017, %v1036
      %v1041 = vmul.f32 %v1019, %v1037
      %v1042 = vmul.f32 %v1021, %v1038
      %v1043 = vmul.f32 %v1023, %v1039
      %1046 = vrot.lane.b32.xlu0 %v725, 96
      %v1047 = vpop.permute.xlu0 %1046
      %1048 = vrot.lane.b32.xlu0 %v728, 96
      %v1049 = vpop.permute.xlu0 %1048
      %v1053 = vsel %vm819, %v1040, 0
      %v1056 = vsel %vm819, %v1041, 0
      %1058 = vmatpush.msra.mxu0 0.0
      %1059 = vmatpush.msra.mxu0 0.0
      %1060 = vmatpush.msra.mxu0 0.0
      %1061 = vmatpush.msra.mxu0 0.0
      %1062 = vmatpush.msra.mxu0 0.0
      %1063 = vmatpush.msra.mxu0 0.0
      %1064 = vmatpush.msra.mxu0 0.0
      %1065 = vmatpush.msra.mxu0 0.0
      %1066 = vmatpush.msra.mxu0 0.0
      %1067 = vmatpush.msra.mxu0 0.0
      %1068 = vmatpush.msra.mxu0 0.0
      %1069 = vmatpush.msra.mxu0 0.0
      %1070 = vmatpush.msra.mxu0 0.0
      %1071 = vmatpush.msra.mxu0 0.0
      %1072 = vmatpush.msra.mxu0 %v1049
      %1073 = vmatpush.msra.mxu0 %v1047
      %1074 = vmatmul.f32.gmra.mxu0 %v1053
      %v1075 = vpop.f32.mrf.mxu0
      %v1076 = vadd.f32 0.0, %v1075
      %1077 = vmatmul.f32.gmra.mxu0 %v1056
      %v1078 = vpop.f32.mrf.mxu0
      %v1079 = vadd.f32 0.0, %v1078
      %1080 = vdwg.mxu0
      %1083 = vrot.lane.b32.xlu0 %v731, 96
      %v1084 = vpop.permute.xlu0 %1083
      %1085 = vrot.lane.b32.xlu0 %v734, 96
      %v1086 = vpop.permute.xlu0 %1085
      %v1090 = vsel %vm819, %v1042, 0
      %v1093 = vsel %vm819, %v1043, 0
      %1095 = vmatpush.msra.mxu0 0.0
      %1096 = vmatpush.msra.mxu0 0.0
      %1097 = vmatpush.msra.mxu0 0.0
      %1098 = vmatpush.msra.mxu0 0.0
      %1099 = vmatpush.msra.mxu0 0.0
      %1100 = vmatpush.msra.mxu0 0.0
      %1101 = vmatpush.msra.mxu0 0.0
      %1102 = vmatpush.msra.mxu0 0.0
      %1103 = vmatpush.msra.mxu0 0.0
      %1104 = vmatpush.msra.mxu0 0.0
      %1105 = vmatpush.msra.mxu0 0.0
      %1106 = vmatpush.msra.mxu0 0.0
      %1107 = vmatpush.msra.mxu0 0.0
      %1108 = vmatpush.msra.mxu0 0.0
      %1109 = vmatpush.msra.mxu0 %v1086
      %1110 = vmatpush.msra.mxu0 %v1084
      %1111 = vmatmul.f32.gmra.mxu0 %v1090
      %v1112 = vpop.f32.mrf.mxu0
      %v1113 = vadd.f32 0.0, %v1112
      %1114 = vmatmul.f32.gmra.mxu0 %v1093
      %v1115 = vpop.f32.mrf.mxu0
      %v1116 = vadd.f32 0.0, %v1115
      %1117 = vdwg.mxu0
      %v1118 = vadd.f32 %v888, %v1076
      %v1119 = vadd.f32 %v891, %v1079
      %v1120 = vadd.f32 %v917, %v1113
      %v1121 = vadd.f32 %v920, %v1116
      %1122 = vrot.lane.b32.xlu0 %v688, 96
      %v1123 = vpop.permute.xlu0 %1122
      %1124 = vrot.lane.b32.xlu0 %v691, 96
      %v1125 = vpop.permute.xlu0 %1124
      %1126 = vrot.lane.b32.xlu0 %v688, 88
      %v1127 = vpop.permute.xlu0 %1126
      %1128 = vrot.lane.b32.xlu0 %v691, 88
      %v1129 = vpop.permute.xlu0 %1128
      %v1130 = vsel %vm750, %v1123, 0
      %v1132 = vsel %vm750, %v1125, 0
      %v1134 = vsel %vm750, %v1127, 0
      %v1136 = vsel %vm750, %v1129, 0
      %1138 = vmatpush.xpose.msra.mxu0 0.0
      %1139 = vmatpush.xpose.msra.mxu0 0.0
      %1140 = vmatpush.xpose.msra.mxu0 0.0
      %1141 = vmatpush.xpose.msra.mxu0 0.0
      %1142 = vmatpush.xpose.msra.mxu0 0.0
      %1143 = vmatpush.xpose.msra.mxu0 0.0
      %1144 = vmatpush.xpose.msra.mxu0 0.0
      %1145 = vmatpush.xpose.msra.mxu0 0.0
      %1146 = vmatpush.xpose.msra.mxu0 0.0
      %1147 = vmatpush.xpose.msra.mxu0 0.0
      %1148 = vmatpush.xpose.msra.mxu0 0.0
      %1149 = vmatpush.xpose.msra.mxu0 0.0
      %1150 = vmatpush.xpose.msra.mxu0 0.0
      %1151 = vmatpush.xpose.msra.mxu0 0.0
      %1152 = vmatpush.xpose.msra.mxu0 %v1136
      %1153 = vmatpush.xpose.msra.mxu0 %v1134
      %1154 = vmatmul.f32.gmra.mxu0 %v1130
      %v1155 = vpop.f32.mrf.mxu0
      %v1156 = vadd.f32 %v740, %v1155
      %1157 = vmatmul.f32.gmra.mxu0 %v1132
      %v1158 = vpop.f32.mrf.mxu0
      %v1159 = vadd.f32 %v741, %v1158
      %1160 = vdwg.mxu0
      %1161 = vrot.lane.b32.xlu0 %v694, 96
      %v1162 = vpop.permute.xlu0 %1161
      %1163 = vrot.lane.b32.xlu0 %v697, 96
      %v1164 = vpop.permute.xlu0 %1163
      %1165 = vrot.lane.b32.xlu0 %v694, 88
      %v1166 = vpop.permute.xlu0 %1165
      %1167 = vrot.lane.b32.xlu0 %v697, 88
      %v1168 = vpop.permute.xlu0 %1167
      %v1169 = vsel %vm750, %v1162, 0
      %v1171 = vsel %vm750, %v1164, 0
      %v1173 = vsel %vm750, %v1166, 0
      %v1175 = vsel %vm750, %v1168, 0
      %1177 = vmatpush.xpose.msra.mxu0 0.0
      %1178 = vmatpush.xpose.msra.mxu0 0.0
      %1179 = vmatpush.xpose.msra.mxu0 0.0
      %1180 = vmatpush.xpose.msra.mxu0 0.0
      %1181 = vmatpush.xpose.msra.mxu0 0.0
      %1182 = vmatpush.xpose.msra.mxu0 0.0
      %1183 = vmatpush.xpose.msra.mxu0 0.0
      %1184 = vmatpush.xpose.msra.mxu0 0.0
      %1185 = vmatpush.xpose.msra.mxu0 0.0
      %1186 = vmatpush.xpose.msra.mxu0 0.0
      %1187 = vmatpush.xpose.msra.mxu0 0.0
      %1188 = vmatpush.xpose.msra.mxu0 0.0
      %1189 = vmatpush.xpose.msra.mxu0 0.0
      %1190 = vmatpush.xpose.msra.mxu0 0.0
      %1191 = vmatpush.xpose.msra.mxu0 %v1175
      %1192 = vmatpush.xpose.msra.mxu0 %v1173
      %1193 = vmatmul.f32.gmra.mxu0 %v1169
      %v1194 = vpop.f32.mrf.mxu0
      %v1195 = vadd.f32 %v740, %v1194
      %1196 = vmatmul.f32.gmra.mxu0 %v1171
      %v1197 = vpop.f32.mrf.mxu0
      %v1198 = vadd.f32 %v741, %v1197
      %1199 = vdwg.mxu0
      %v1200 = vsel %vm819, %v1156, -inf
      %1201 = vmax.xlane.f32.xlu0 %v1200
      %v1202 = vpop.xlane.xlu0 %1201
      %v1203 = vsel %vm819, %v1159, -inf
      %1204 = vmax.xlane.f32.xlu0 %v1203
      %v1205 = vpop.xlane.xlu0 %1204
      %v1206 = vsel %vm819, %v1195, -inf
      %1207 = vmax.xlane.f32.xlu0 %v1206
      %v1208 = vpop.xlane.xlu0 %1207
      %v1209 = vsel %vm819, %v1198, -inf
      %1210 = vmax.xlane.f32.xlu0 %v1209
      %v1211 = vpop.xlane.xlu0 %1210
      %v1212 = vsub.f32 %v1156, %v1202
      %v1213 = vsub.f32 %v1159, %v1205
      %v1214 = vsub.f32 %v1195, %v1208
      %v1215 = vsub.f32 %v1198, %v1211
      %v1216 = vmul.f32 %v1212, 1.442695
      %v1217 = vpow.pop %v1216
      %v1218 = vmul.f32 %v1213, 1.442695
      %v1219 = vpow.pop %v1218
      %v1220 = vmul.f32 %v1214, 1.442695
      %v1221 = vpow.pop %v1220
      %v1222 = vmul.f32 %v1215, 1.442695
      %v1223 = vpow.pop %v1222
      %v1224 = vsel %vm819, %v1217, 0.0
      %1225 = vadd.xlane.f32.xlu0 %v1224
      %v1226 = vpop.xlane.xlu0 %1225
      %v1227 = vsel %vm819, %v1219, 0.0
      %1228 = vadd.xlane.f32.xlu0 %v1227
      %v1229 = vpop.xlane.xlu0 %1228
      %v1230 = vsel %vm819, %v1221, 0.0
      %1231 = vadd.xlane.f32.xlu0 %v1230
      %v1232 = vpop.xlane.xlu0 %1231
      %v1233 = vsel %vm819, %v1223, 0.0
      %1234 = vadd.xlane.f32.xlu0 %v1233
      %v1235 = vpop.xlane.xlu0 %1234
      %v1236 = vrcp.pop %v1226
      %v1237 = vrcp.pop %v1229
      %v1238 = vrcp.pop %v1232
      %v1239 = vrcp.pop %v1235
      %v1240 = vmul.f32 %v1217, %v1236
      %v1241 = vmul.f32 %v1219, %v1237
      %v1242 = vmul.f32 %v1221, %v1238
      %v1243 = vmul.f32 %v1223, %v1239
      %1244 = vrot.lane.b32.xlu0 %v725, 64
      %v1245 = vpop.permute.xlu0 %1244
      %1246 = vrot.lane.b32.xlu0 %v728, 64
      %v1247 = vpop.permute.xlu0 %1246
      %v1251 = vsel %vm819, %v1240, 0
      %v1254 = vsel %vm819, %v1241, 0
      %1256 = vmatpush.msra.mxu0 0.0
      %1257 = vmatpush.msra.mxu0 0.0
      %1258 = vmatpush.msra.mxu0 0.0
      %1259 = vmatpush.msra.mxu0 0.0
      %1260 = vmatpush.msra.mxu0 0.0
      %1261 = vmatpush.msra.mxu0 0.0
      %1262 = vmatpush.msra.mxu0 0.0
      %1263 = vmatpush.msra.mxu0 0.0
      %1264 = vmatpush.msra.mxu0 0.0
      %1265 = vmatpush.msra.mxu0 0.0
      %1266 = vmatpush.msra.mxu0 0.0
      %1267 = vmatpush.msra.mxu0 0.0
      %1268 = vmatpush.msra.mxu0 0.0
      %1269 = vmatpush.msra.mxu0 0.0
      %1270 = vmatpush.msra.mxu0 %v1247
      %1271 = vmatpush.msra.mxu0 %v1245
      %1272 = vmatmul.f32.gmra.mxu0 %v1251
      %v1273 = vpop.f32.mrf.mxu0
      %v1274 = vadd.f32 0.0, %v1273
      %1275 = vmatmul.f32.gmra.mxu0 %v1254
      %v1276 = vpop.f32.mrf.mxu0
      %v1277 = vadd.f32 0.0, %v1276
      %1278 = vdwg.mxu0
      %1279 = vrot.lane.b32.xlu0 %v731, 64
      %v1280 = vpop.permute.xlu0 %1279
      %1281 = vrot.lane.b32.xlu0 %v734, 64
      %v1282 = vpop.permute.xlu0 %1281
      %v1286 = vsel %vm819, %v1242, 0
      %v1289 = vsel %vm819, %v1243, 0
      %1291 = vmatpush.msra.mxu0 0.0
      %1292 = vmatpush.msra.mxu0 0.0
      %1293 = vmatpush.msra.mxu0 0.0
      %1294 = vmatpush.msra.mxu0 0.0
      %1295 = vmatpush.msra.mxu0 0.0
      %1296 = vmatpush.msra.mxu0 0.0
      %1297 = vmatpush.msra.mxu0 0.0
      %1298 = vmatpush.msra.mxu0 0.0
      %1299 = vmatpush.msra.mxu0 0.0
      %1300 = vmatpush.msra.mxu0 0.0
      %1301 = vmatpush.msra.mxu0 0.0
      %1302 = vmatpush.msra.mxu0 0.0
      %1303 = vmatpush.msra.mxu0 0.0
      %1304 = vmatpush.msra.mxu0 0.0
      %1305 = vmatpush.msra.mxu0 %v1282
      %1306 = vmatpush.msra.mxu0 %v1280
      %1307 = vmatmul.f32.gmra.mxu0 %v1286
      %v1308 = vpop.f32.mrf.mxu0
      %v1309 = vadd.f32 0.0, %v1308
      %1310 = vmatmul.f32.gmra.mxu0 %v1289
      %v1311 = vpop.f32.mrf.mxu0
      %v1312 = vadd.f32 0.0, %v1311
      %1313 = vdwg.mxu0
      %v1314 = vadd.f32 %v1118, %v1274
      %v1315 = vadd.f32 %v1119, %v1277
      %v1316 = vadd.f32 %v1120, %v1309
      %v1317 = vadd.f32 %v1121, %v1312
      %1318 = vrot.lane.b32.xlu0 %v688, 80
      %v1319 = vpop.permute.xlu0 %1318
      %1320 = vrot.lane.b32.xlu0 %v691, 80
      %v1321 = vpop.permute.xlu0 %1320
      %1322 = vrot.lane.b32.xlu0 %v688, 72
      %v1323 = vpop.permute.xlu0 %1322
      %1324 = vrot.lane.b32.xlu0 %v691, 72
      %v1325 = vpop.permute.xlu0 %1324
      %v1326 = vsel %vm750, %v1319, 0
      %v1328 = vsel %vm750, %v1321, 0
      %v1330 = vsel %vm750, %v1323, 0
      %v1332 = vsel %vm750, %v1325, 0
      %1334 = vmatpush.xpose.msra.mxu0 0.0
      %1335 = vmatpush.xpose.msra.mxu0 0.0
      %1336 = vmatpush.xpose.msra.mxu0 0.0
      %1337 = vmatpush.xpose.msra.mxu0 0.0
      %1338 = vmatpush.xpose.msra.mxu0 0.0
      %1339 = vmatpush.xpose.msra.mxu0 0.0
      %1340 = vmatpush.xpose.msra.mxu0 0.0
      %1341 = vmatpush.xpose.msra.mxu0 0.0
      %1342 = vmatpush.xpose.msra.mxu0 0.0
      %1343 = vmatpush.xpose.msra.mxu0 0.0
      %1344 = vmatpush.xpose.msra.mxu0 0.0
      %1345 = vmatpush.xpose.msra.mxu0 0.0
      %1346 = vmatpush.xpose.msra.mxu0 0.0
      %1347 = vmatpush.xpose.msra.mxu0 0.0
      %1348 = vmatpush.xpose.msra.mxu0 %v1332
      %1349 = vmatpush.xpose.msra.mxu0 %v1330
      %1350 = vmatmul.f32.gmra.mxu0 %v1326
      %v1351 = vpop.f32.mrf.mxu0
      %v1352 = vadd.f32 %v742, %v1351
      %1353 = vmatmul.f32.gmra.mxu0 %v1328
      %v1354 = vpop.f32.mrf.mxu0
      %v1355 = vadd.f32 %v743, %v1354
      %1356 = vdwg.mxu0
      %1357 = vrot.lane.b32.xlu0 %v694, 80
      %v1358 = vpop.permute.xlu0 %1357
      %1359 = vrot.lane.b32.xlu0 %v697, 80
      %v1360 = vpop.permute.xlu0 %1359
      %1361 = vrot.lane.b32.xlu0 %v694, 72
      %v1362 = vpop.permute.xlu0 %1361
      %1363 = vrot.lane.b32.xlu0 %v697, 72
      %v1364 = vpop.permute.xlu0 %1363
      %v1365 = vsel %vm750, %v1358, 0
      %v1367 = vsel %vm750, %v1360, 0
      %v1369 = vsel %vm750, %v1362, 0
      %v1371 = vsel %vm750, %v1364, 0
      %1373 = vmatpush.xpose.msra.mxu0 0.0
      %1374 = vmatpush.xpose.msra.mxu0 0.0
      %1375 = vmatpush.xpose.msra.mxu0 0.0
      %1376 = vmatpush.xpose.msra.mxu0 0.0
      %1377 = vmatpush.xpose.msra.mxu0 0.0
      %1378 = vmatpush.xpose.msra.mxu0 0.0
      %1379 = vmatpush.xpose.msra.mxu0 0.0
      %1380 = vmatpush.xpose.msra.mxu0 0.0
      %1381 = vmatpush.xpose.msra.mxu0 0.0
      %1382 = vmatpush.xpose.msra.mxu0 0.0
      %1383 = vmatpush.xpose.msra.mxu0 0.0
      %1384 = vmatpush.xpose.msra.mxu0 0.0
      %1385 = vmatpush.xpose.msra.mxu0 0.0
      %1386 = vmatpush.xpose.msra.mxu0 0.0
      %1387 = vmatpush.xpose.msra.mxu0 %v1371
      %1388 = vmatpush.xpose.msra.mxu0 %v1369
      %1389 = vmatmul.f32.gmra.mxu0 %v1365
      %v1390 = vpop.f32.mrf.mxu0
      %v1391 = vadd.f32 %v742, %v1390
      %1392 = vmatmul.f32.gmra.mxu0 %v1367
      %v1393 = vpop.f32.mrf.mxu0
      %v1394 = vadd.f32 %v743, %v1393
      %1395 = vdwg.mxu0
      %v1396 = vsel %vm819, %v1352, -inf
      %1397 = vmax.xlane.f32.xlu0 %v1396
      %v1398 = vpop.xlane.xlu0 %1397
      %v1399 = vsel %vm819, %v1355, -inf
      %1400 = vmax.xlane.f32.xlu0 %v1399
      %v1401 = vpop.xlane.xlu0 %1400
      %v1402 = vsel %vm819, %v1391, -inf
      %1403 = vmax.xlane.f32.xlu0 %v1402
      %v1404 = vpop.xlane.xlu0 %1403
      %v1405 = vsel %vm819, %v1394, -inf
      %1406 = vmax.xlane.f32.xlu0 %v1405
      %v1407 = vpop.xlane.xlu0 %1406
      %v1408 = vsub.f32 %v1352, %v1398
      %v1409 = vsub.f32 %v1355, %v1401
      %v1410 = vsub.f32 %v1391, %v1404
      %v1411 = vsub.f32 %v1394, %v1407
      %v1412 = vmul.f32 %v1408, 1.442695
      %v1413 = vpow.pop %v1412
      %v1414 = vmul.f32 %v1409, 1.442695
      %v1415 = vpow.pop %v1414
      %v1416 = vmul.f32 %v1410, 1.442695
      %v1417 = vpow.pop %v1416
      %v1418 = vmul.f32 %v1411, 1.442695
      %v1419 = vpow.pop %v1418
      %v1420 = vsel %vm819, %v1413, 0.0
      %1421 = vadd.xlane.f32.xlu0 %v1420
      %v1422 = vpop.xlane.xlu0 %1421
      %v1423 = vsel %vm819, %v1415, 0.0
      %1424 = vadd.xlane.f32.xlu0 %v1423
      %v1425 = vpop.xlane.xlu0 %1424
      %v1426 = vsel %vm819, %v1417, 0.0
      %1427 = vadd.xlane.f32.xlu0 %v1426
      %v1428 = vpop.xlane.xlu0 %1427
      %v1429 = vsel %vm819, %v1419, 0.0
      %1430 = vadd.xlane.f32.xlu0 %v1429
      %v1431 = vpop.xlane.xlu0 %1430
      %v1432 = vrcp.pop %v1422
      %v1433 = vrcp.pop %v1425
      %v1434 = vrcp.pop %v1428
      %v1435 = vrcp.pop %v1431
      %v1436 = vmul.f32 %v1413, %v1432
      %v1437 = vmul.f32 %v1415, %v1433
      %v1438 = vmul.f32 %v1417, %v1434
      %v1439 = vmul.f32 %v1419, %v1435
      %1440 = vrot.lane.b32.xlu0 %v725, 32
      %v1441 = vpop.permute.xlu0 %1440
      %1442 = vrot.lane.b32.xlu0 %v728, 32
      %v1443 = vpop.permute.xlu0 %1442
      %v1447 = vsel %vm819, %v1436, 0
      %v1450 = vsel %vm819, %v1437, 0
      %1452 = vmatpush.msra.mxu0 0.0
      %1453 = vmatpush.msra.mxu0 0.0
      %1454 = vmatpush.msra.mxu0 0.0
      %1455 = vmatpush.msra.mxu0 0.0
      %1456 = vmatpush.msra.mxu0 0.0
      %1457 = vmatpush.msra.mxu0 0.0
      %1458 = vmatpush.msra.mxu0 0.0
      %1459 = vmatpush.msra.mxu0 0.0
      %1460 = vmatpush.msra.mxu0 0.0
      %1461 = vmatpush.msra.mxu0 0.0
      %1462 = vmatpush.msra.mxu0 0.0
      %1463 = vmatpush.msra.mxu0 0.0
      %1464 = vmatpush.msra.mxu0 0.0
      %1465 = vmatpush.msra.mxu0 0.0
      %1466 = vmatpush.msra.mxu0 %v1443
      %1467 = vmatpush.msra.mxu0 %v1441
      %1468 = vmatmul.f32.gmra.mxu0 %v1447
      %v1469 = vpop.f32.mrf.mxu0
      %v1470 = vadd.f32 0.0, %v1469
      %1471 = vmatmul.f32.gmra.mxu0 %v1450
      %v1472 = vpop.f32.mrf.mxu0
      %v1473 = vadd.f32 0.0, %v1472
      %1474 = vdwg.mxu0
      %1475 = vrot.lane.b32.xlu0 %v731, 32
      %v1476 = vpop.permute.xlu0 %1475
      %1477 = vrot.lane.b32.xlu0 %v734, 32
      %v1478 = vpop.permute.xlu0 %1477
      %v1482 = vsel %vm819, %v1438, 0
      %v1485 = vsel %vm819, %v1439, 0
      %1487 = vmatpush.msra.mxu0 0.0
      %1488 = vmatpush.msra.mxu0 0.0
      %1489 = vmatpush.msra.mxu0 0.0
      %1490 = vmatpush.msra.mxu0 0.0
      %1491 = vmatpush.msra.mxu0 0.0
      %1492 = vmatpush.msra.mxu0 0.0
      %1493 = vmatpush.msra.mxu0 0.0
      %1494 = vmatpush.msra.mxu0 0.0
      %1495 = vmatpush.msra.mxu0 0.0
      %1496 = vmatpush.msra.mxu0 0.0
      %1497 = vmatpush.msra.mxu0 0.0
      %1498 = vmatpush.msra.mxu0 0.0
      %1499 = vmatpush.msra.mxu0 0.0
      %1500 = vmatpush.msra.mxu0 0.0
      %1501 = vmatpush.msra.mxu0 %v1478
      %1502 = vmatpush.msra.mxu0 %v1476
      %1503 = vmatmul.f32.gmra.mxu0 %v1482
      %v1504 = vpop.f32.mrf.mxu0
      %v1505 = vadd.f32 0.0, %v1504
      %1506 = vmatmul.f32.gmra.mxu0 %v1485
      %v1507 = vpop.f32.mrf.mxu0
      %v1508 = vadd.f32 0.0, %v1507
      %1509 = vdwg.mxu0
      %v1510 = vadd.f32 %v1314, %v1470
      %v1511 = vadd.f32 %v1315, %v1473
      %v1512 = vadd.f32 %v1316, %v1505
      %v1513 = vadd.f32 %v1317, %v1508
      %v1514 = vadd.f32 %v534, %v1510
      %v1515 = vadd.f32 %v535, %v1511
      %v1516 = vadd.f32 %v536, %v1512
      %v1517 = vadd.f32 %v537, %v1513
      %v1518 = vld [vmem:[%s7] sm:$0x1]
      %v1520 = vperm.slane %v1518, 0
      %v1522 = vadd.f32 %v1514, %v1520
      %v1523 = vadd.f32 %v1515, %v1520
      %v1524 = vadd.f32 %v1516, %v1520
      %v1525 = vadd.f32 %v1517, %v1520
      %v1526 = vld [vmem:[%s9] sm:$0x1]
      %v1527 = vld [vmem:[%s10] sm:$0x1]
      %v1528 = vsel %vm540, %v1522, 0.0
      %1529 = vadd.xlane.f32.xlu0 %v1528
      %v1530 = vpop.xlane.xlu0 %1529
      %v1531 = vsel %vm540, %v1523, 0.0
      %1532 = vadd.xlane.f32.xlu0 %v1531
      %v1533 = vpop.xlane.xlu0 %1532
      %v1534 = vsel %vm540, %v1524, 0.0
      %1535 = vadd.xlane.f32.xlu0 %v1534
      %v1536 = vpop.xlane.xlu0 %1535
      %v1537 = vsel %vm540, %v1525, 0.0
      %1538 = vadd.xlane.f32.xlu0 %v1537
      %v1539 = vpop.xlane.xlu0 %1538
      %v1540 = vmul.f32 %v1530, %v559
      %v1541 = vmul.f32 %v1533, %v559
      %v1542 = vmul.f32 %v1536, %v559
      %v1543 = vmul.f32 %v1539, %v559
      %v1544 = vsub.f32 %v1522, %v1540
      %v1545 = vsub.f32 %v1523, %v1541
      %v1546 = vsub.f32 %v1524, %v1542
      %v1547 = vsub.f32 %v1525, %v1543
      %v1548 = vmul.f32 %v1544, %v1544
      %v1549 = vmul.f32 %v1545, %v1545
      %v1550 = vmul.f32 %v1546, %v1546
      %v1551 = vmul.f32 %v1547, %v1547
      %v1552 = vsel %vm540, %v1548, 0.0
      %1553 = vadd.xlane.f32.xlu0 %v1552
      %v1554 = vpop.xlane.xlu0 %1553
      %v1555 = vsel %vm540, %v1549, 0.0
      %1556 = vadd.xlane.f32.xlu0 %v1555
      %v1557 = vpop.xlane.xlu0 %1556
      %v1558 = vsel %vm540, %v1550, 0.0
      %1559 = vadd.xlane.f32.xlu0 %v1558
      %v1560 = vpop.xlane.xlu0 %1559
      %v1561 = vsel %vm540, %v1551, 0.0
      %1562 = vadd.xlane.f32.xlu0 %v1561
      %v1563 = vpop.xlane.xlu0 %1562
      %v1564 = vmul.f32 %v1554, %v559
      %v1565 = vmul.f32 %v1557, %v559
      %v1566 = vmul.f32 %v1560, %v559
      %v1567 = vmul.f32 %v1563, %v559
      %v1568 = vadd.f32 %v1564, 1e-05
      %v1569 = vadd.f32 %v1565, 1e-05
      %v1570 = vadd.f32 %v1566, 1e-05
      %v1571 = vadd.f32 %v1567, 1e-05
      %v1572 = vrsqrt.pop %v1568
      %v1573 = vmul.f32 %v1572, %v1568
      %v1574 = vmul.f32 %v1573, %v1572
      %v1575 = vmul.f32 0.5, %v1574
      %v1576 = vsub.f32 1.5, %v1575
      %v1577 = vmul.f32 %v1572, %v1576
      %vm1578 = vweird.f32 %v1568
      %vm1579 = vweird.f32 %v1572
      %vm1580 = vmor %vm1578, %vm1579
      %v1581 = vsel %vm1580, %v1572, %v1577
      %v1582 = vrsqrt.pop %v1569
      %v1583 = vmul.f32 %v1582, %v1569
      %v1584 = vmul.f32 %v1583, %v1582
      %v1585 = vmul.f32 0.5, %v1584
      %v1586 = vsub.f32 1.5, %v1585
      %v1587 = vmul.f32 %v1582, %v1586
      %vm1588 = vweird.f32 %v1569
      %vm1589 = vweird.f32 %v1582
      %vm1590 = vmor %vm1588, %vm1589
      %v1591 = vsel %vm1590, %v1582, %v1587
      %v1592 = vrsqrt.pop %v1570
      %v1593 = vmul.f32 %v1592, %v1570
      %v1594 = vmul.f32 %v1593, %v1592
      %v1595 = vmul.f32 0.5, %v1594
      %v1596 = vsub.f32 1.5, %v1595
      %v1597 = vmul.f32 %v1592, %v1596
      %vm1598 = vweird.f32 %v1570
      %vm1599 = vweird.f32 %v1592
      %vm1600 = vmor %vm1598, %vm1599
      %v1601 = vsel %vm1600, %v1592, %v1597
      %v1602 = vrsqrt.pop %v1571
      %v1603 = vmul.f32 %v1602, %v1571
      %v1604 = vmul.f32 %v1603, %v1602
      %v1605 = vmul.f32 0.5, %v1604
      %v1606 = vsub.f32 1.5, %v1605
      %v1607 = vmul.f32 %v1602, %v1606
      %vm1608 = vweird.f32 %v1571
      %vm1609 = vweird.f32 %v1602
      %vm1610 = vmor %vm1608, %vm1609
      %v1611 = vsel %vm1610, %v1602, %v1607
      %v1612 = vmul.f32 %v1544, %v1581
      %v1613 = vmul.f32 %v1545, %v1591
      %v1614 = vmul.f32 %v1546, %v1601
      %v1615 = vmul.f32 %v1547, %v1611
      %v1617 = vperm.slane %v1526, 0
      %v1619 = vmul.f32 %v1612, %v1617
      %v1620 = vmul.f32 %v1613, %v1617
      %v1621 = vmul.f32 %v1614, %v1617
      %v1622 = vmul.f32 %v1615, %v1617
      %v1624 = vperm.slane %v1527, 0
      %v1626 = vadd.f32 %v1619, %v1624
      %v1627 = vadd.f32 %v1620, %v1624
      %v1628 = vadd.f32 %v1621, %v1624
      %v1629 = vadd.f32 %v1622, %v1624
      %v1630 = vld [vmem:[%s11] sm:$0xff]
      %v1631 = vld [vmem:[%s11 + $0x8] sm:$0xff]
      %v1632 = vld [vmem:[%s11 + $0x10] sm:$0xff]
      %v1633 = vld [vmem:[%s11 + $0x18] sm:$0xff]
      %v1634 = vld [vmem:[%s12] sm:$0x1]
      %v1636 = vperm.slane %v1634, 0
      %v1639 = vsel %vm540, %v1626, 0
      %v1642 = vsel %vm540, %v1627, 0
      %v1645 = vsel %vm540, %v1628, 0
      %v1648 = vsel %vm540, %v1629, 0
      %1650 = vmatpush.msra.mxu0 0.0
      %1651 = vmatpush.msra.mxu0 0.0
      %1652 = vmatpush.msra.mxu0 0.0
      %1653 = vmatpush.msra.mxu0 0.0
      %1654 = vmatpush.msra.mxu0 0.0
      %1655 = vmatpush.msra.mxu0 0.0
      %1656 = vmatpush.msra.mxu0 0.0
      %1657 = vmatpush.msra.mxu0 0.0
      %1658 = vmatpush.msra.mxu0 0.0
      %1659 = vmatpush.msra.mxu0 0.0
      %1660 = vmatpush.msra.mxu0 0.0
      %1661 = vmatpush.msra.mxu0 0.0
      %1662 = vmatpush.msra.mxu0 %v1633
      %1663 = vmatpush.msra.mxu0 %v1632
      %1664 = vmatpush.msra.mxu0 %v1631
      %1665 = vmatpush.msra.mxu0 %v1630
      %1666 = vmatmul.f32.gmra.mxu0 %v1639
      %v1667 = vpop.f32.mrf.mxu0
      %v1668 = vadd.f32 %v1636, %v1667
      %1669 = vmatmul.f32.gmra.mxu0 %v1642
      %v1670 = vpop.f32.mrf.mxu0
      %v1671 = vadd.f32 %v1636, %v1670
      %1672 = vmatmul.f32.gmra.mxu0 %v1645
      %v1673 = vpop.f32.mrf.mxu0
      %v1674 = vadd.f32 %v1636, %v1673
      %1675 = vmatmul.f32.gmra.mxu0 %v1648
      %v1676 = vpop.f32.mrf.mxu0
      %v1677 = vadd.f32 %v1636, %v1676
      %1678 = vdwg.mxu0
      %v1679 = vmul.f32 %v1668, 0.5
      %v1680 = vmul.f32 %v1671, 0.5
      %v1681 = vmul.f32 %v1674, 0.5
      %v1682 = vmul.f32 %v1677, 0.5
      %v1683 = vmul.f32 %v1668, 0.70710677
      %v1684 = vmul.f32 %v1671, 0.70710677
      %v1685 = vmul.f32 %v1674, 0.70710677
      %v1686 = vmul.f32 %v1677, 0.70710677
      %vm1687 = vcmp.ge.f32.partialorder %v1683, 0.0
      %vm1688 = vcmp.ge.f32.partialorder %v1684, 0.0
      %vm1689 = vcmp.ge.f32.partialorder %v1685, 0.0
      %vm1690 = vcmp.ge.f32.partialorder %v1686, 0.0
      %v1691 = vsel %vm1687, 1.0, -1.0
      %v1692 = vsel %vm1688, 1.0, -1.0
      %v1693 = vsel %vm1689, 1.0, -1.0
      %v1694 = vsel %vm1690, 1.0, -1.0
      %v1695 = vand.u32 2147483647, %v1683
      %v1696 = vand.u32 2147483647, %v1684
      %v1697 = vand.u32 2147483647, %v1685
      %v1698 = vand.u32 2147483647, %v1686
      %v1699 = vmul.f32 %v1695, 0.3275911
      %v1700 = vmul.f32 %v1696, 0.3275911
      %v1701 = vmul.f32 %v1697, 0.3275911
      %v1702 = vmul.f32 %v1698, 0.3275911
      %v1703 = vadd.f32 %v1699, 1.0
      %v1704 = vadd.f32 %v1700, 1.0
      %v1705 = vadd.f32 %v1701, 1.0
      %v1706 = vadd.f32 %v1702, 1.0
      %v1707 = vrcp.pop %v1703
      %v1708 = vrcp.pop %v1704
      %v1709 = vrcp.pop %v1705
      %v1710 = vrcp.pop %v1706
      %v1711 = vmul.f32 %v1707, 1.0614054
      %v1712 = vmul.f32 %v1708, 1.0614054
      %v1713 = vmul.f32 %v1709, 1.0614054
      %v1714 = vmul.f32 %v1710, 1.0614054
      %v1715 = vadd.f32 %v1711, -1.4531521
      %v1716 = vadd.f32 %v1712, -1.4531521
      %v1717 = vadd.f32 %v1713, -1.4531521
      %v1718 = vadd.f32 %v1714, -1.4531521
      %v1719 = vmul.f32 %v1707, %v1715
      %v1720 = vmul.f32 %v1708, %v1716
      %v1721 = vmul.f32 %v1709, %v1717
      %v1722 = vmul.f32 %v1710, %v1718
      %v1723 = vadd.f32 %v1719, 1.4214138
      %v1724 = vadd.f32 %v1720, 1.4214138
      %v1725 = vadd.f32 %v1721, 1.4214138
      %v1726 = vadd.f32 %v1722, 1.4214138
      %v1727 = vmul.f32 %v1707, %v1723
      %v1728 = vmul.f32 %v1708, %v1724
      %v1729 = vmul.f32 %v1709, %v1725
      %v1730 = vmul.f32 %v1710, %v1726
      %v1731 = vadd.f32 %v1727, -0.28449672
      %v1732 = vadd.f32 %v1728, -0.28449672
      %v1733 = vadd.f32 %v1729, -0.28449672
      %v1734 = vadd.f32 %v1730, -0.28449672
      %v1735 = vmul.f32 %v1707, %v1731
      %v1736 = vmul.f32 %v1708, %v1732
      %v1737 = vmul.f32 %v1709, %v1733
      %v1738 = vmul.f32 %v1710, %v1734
      %v1739 = vadd.f32 %v1735, 0.2548296
      %v1740 = vadd.f32 %v1736, 0.2548296
      %v1741 = vadd.f32 %v1737, 0.2548296
      %v1742 = vadd.f32 %v1738, 0.2548296
      %v1743 = vmul.f32 %v1707, %v1739
      %v1744 = vmul.f32 %v1708, %v1740
      %v1745 = vmul.f32 %v1709, %v1741
      %v1746 = vmul.f32 %v1710, %v1742
      %v1747 = vsub.f32 0.0, %v1695
      %v1748 = vsub.f32 0.0, %v1696
      %v1749 = vsub.f32 0.0, %v1697
      %v1750 = vsub.f32 0.0, %v1698
      %v1751 = vmul.f32 %v1747, %v1695
      %v1752 = vmul.f32 %v1748, %v1696
      %v1753 = vmul.f32 %v1749, %v1697
      %v1754 = vmul.f32 %v1750, %v1698
      %v1755 = vmul.f32 %v1751, 1.442695
      %v1756 = vpow.pop %v1755
      %v1757 = vmul.f32 %v1752, 1.442695
      %v1758 = vpow.pop %v1757
      %v1759 = vmul.f32 %v1753, 1.442695
      %v1760 = vpow.pop %v1759
      %v1761 = vmul.f32 %v1754, 1.442695
      %v1762 = vpow.pop %v1761
      %v1763 = vmul.f32 %v1743, %v1756
      %v1764 = vmul.f32 %v1744, %v1758
      %v1765 = vmul.f32 %v1745, %v1760
      %v1766 = vmul.f32 %v1746, %v1762
      %v1767 = vsub.f32 1.0, %v1763
      %v1768 = vsub.f32 1.0, %v1764
      %v1769 = vsub.f32 1.0, %v1765
      %v1770 = vsub.f32 1.0, %v1766
      %v1771 = vmul.f32 %v1691, %v1767
      %v1772 = vmul.f32 %v1692, %v1768
      %v1773 = vmul.f32 %v1693, %v1769
      %v1774 = vmul.f32 %v1694, %v1770
      %v1775 = vadd.f32 %v1771, 1.0
      %v1776 = vadd.f32 %v1772, 1.0
      %v1777 = vadd.f32 %v1773, 1.0
      %v1778 = vadd.f32 %v1774, 1.0
      %v1779 = vmul.f32 %v1679, %v1775
      %v1780 = vmul.f32 %v1680, %v1776
      %v1781 = vmul.f32 %v1681, %v1777
      %v1782 = vmul.f32 %v1682, %v1778
      %v1783 = vld [vmem:[%s13] sm:$0xff]
      %v1784 = vld [vmem:[%s13 + $0x8] sm:$0xff]
      %v1785 = vld [vmem:[%s13 + $0x10] sm:$0xff]
      %v1786 = vld [vmem:[%s13 + $0x18] sm:$0xff]
      %v1787 = vld [vmem:[%s13 + $0x20] sm:$0xff]
      %v1788 = vld [vmem:[%s13 + $0x28] sm:$0xff]
      %v1789 = vld [vmem:[%s13 + $0x30] sm:$0xff]
      %v1790 = vld [vmem:[%s13 + $0x38] sm:$0xff]
      %v1791 = vld [vmem:[%s13 + $0x40] sm:$0xff]
      %v1792 = vld [vmem:[%s13 + $0x48] sm:$0xff]
      %v1793 = vld [vmem:[%s13 + $0x50] sm:$0xff]
      %v1794 = vld [vmem:[%s13 + $0x58] sm:$0xff]
      %v1795 = vld [vmem:[%s13 + $0x60] sm:$0xff]
      %v1796 = vld [vmem:[%s13 + $0x68] sm:$0xff]
      %v1797 = vld [vmem:[%s13 + $0x70] sm:$0xff]
      %v1798 = vld [vmem:[%s13 + $0x78] sm:$0xff]
      %1799 = vmatpush.msra.mxu0 %v1798
      %1800 = vmatpush.msra.mxu0 %v1797
      %1801 = vmatpush.msra.mxu0 %v1796
      %1802 = vmatpush.msra.mxu0 %v1795
      %1803 = vmatpush.msra.mxu0 %v1794
      %1804 = vmatpush.msra.mxu0 %v1793
      %1805 = vmatpush.msra.mxu0 %v1792
      %1806 = vmatpush.msra.mxu0 %v1791
      %1807 = vmatpush.msra.mxu0 %v1790
      %1808 = vmatpush.msra.mxu0 %v1789
      %1809 = vmatpush.msra.mxu0 %v1788
      %1810 = vmatpush.msra.mxu0 %v1787
      %1811 = vmatpush.msra.mxu0 %v1786
      %1812 = vmatpush.msra.mxu0 %v1785
      %1813 = vmatpush.msra.mxu0 %v1784
      %1814 = vmatpush.msra.mxu0 %v1783
      %1815 = vmatmul.f32.gmra.mxu0 %v1779
      %v1816 = vpop.f32.mrf.mxu0
      %v1817 = vadd.f32 0.0, %v1816
      %1818 = vmatmul.f32.gmra.mxu0 %v1780
      %v1819 = vpop.f32.mrf.mxu0
      %v1820 = vadd.f32 0.0, %v1819
      %1821 = vmatmul.f32.gmra.mxu0 %v1781
      %v1822 = vpop.f32.mrf.mxu0
      %v1823 = vadd.f32 0.0, %v1822
      %1824 = vmatmul.f32.gmra.mxu0 %v1782
      %v1825 = vpop.f32.mrf.mxu0
      %v1826 = vadd.f32 0.0, %v1825
      %1827 = vdwg.mxu0
      %v1828 = vadd.f32 %v1522, %v1817
      %v1829 = vadd.f32 %v1523, %v1820
      %v1830 = vadd.f32 %v1524, %v1823
      %v1831 = vadd.f32 %v1525, %v1826
      %v1832 = vld [vmem:[%s14] sm:$0x1]
      %v1834 = vperm.slane %v1832, 0
      %v1836 = vadd.f32 %v1828, %v1834
      %v1837 = vadd.f32 %v1829, %v1834
      %v1838 = vadd.f32 %v1830, %v1834
      %v1839 = vadd.f32 %v1831, %v1834
      %1840 = vst.msk [vmem:[%s532] sm:$0xff] %vm540, %v1836
      %1841 = vst.msk [vmem:[%s532 + $0x8] sm:$0xff] %vm540, %v1837
      %1842 = vst.msk [vmem:[%s532 + $0x10] sm:$0xff] %vm540, %v1838
      %1843 = vst.msk [vmem:[%s532 + $0x18] sm:$0xff] %vm540, %v1839
      %s1844 = smul.u32 4, %s31
      %p1845 = scmp.lt.s32.totalorder %s30, 1
      %s1846 = scalar_select %p1845, %s30, 1
      %p1847 = scmp.lt.s32.totalorder %s1844, 7
      %s1848 = scalar_select %p1847, %s1844, 7
      %s1849 = smul.addr %s1846, 8
      %s1850 = sadd.s32 %s1848, %s1849
      %s1851 = smul.addr %s1850, 8
      %s1852 = scalar_lea.vmem %s15, %s1851
      // Predicated region
      $region81: #{tpu_custom_call.1} parent=79 // pred_check
        %p1853 = pneg %p380
      $region82: #{tpu_custom_call.1} parent=79 // pred_check_branch
        %1855 = sbr.rel (%p1853) target = $region84
      $region83: #{tpu_custom_call.1} parent=79 // pred_region
        %s1856 = smul.u32 4, %s31
      $region84: #{tpu_custom_call.1} parent=79 // pred_fallthru
        _
    $region80: #{tpu_custom_call.1} parent=5 // pred_fallthru
      _
    %p1857 = scmp.le.s32.totalorder 2, %s21
    // Predicated region
    $region85: #{tpu_custom_call.1} parent=5 // pred_check
      %p1858 = pneg %p1857
    $region86: #{tpu_custom_call.1} parent=5 // pred_check_branch
      %1860 = sbr.rel (%p1858) target = $region88
    $region87: #{tpu_custom_call.1} parent=5 // pred_region
      %s1861 = ssub.s32 %s21, 2
      // Predicated region
      $region89: #{tpu_custom_call.1} parent=87 // pred_check
        %p1862 = pneg %p386
      $region90: #{tpu_custom_call.1} parent=87 // pred_check_branch
        %1864 = sbr.rel (%p1862) target = $region92
      $region91: #{tpu_custom_call.1} parent=87 // pred_region
        %s1865 = smul.u32 4, %s33
        %p1866 = scmp.lt.s32.totalorder %s32, 1
        %s1867 = scalar_select %p1866, %s32, 1
        %p1868 = scmp.lt.s32.totalorder %s1865, 7
        %s1869 = scalar_select %p1868, %s1865, 7
        %s1870 = smul.addr %s1867, 8
        %s1871 = sadd.s32 %s1869, %s1870
        %s1872 = smul.addr %s1871, 8
        %s1873 = scalar_lea.vmem %s15, %s1872
      $region92: #{tpu_custom_call.1} parent=87 // pred_fallthru
        _
    $region88: #{tpu_custom_call.1} parent=5 // pred_fallthru
      _
  $region6: #{tpu_custom_call.1} parent=0 // loop_footer
    %s25 = sadd.s32 1, %s21
  $region7: #{tpu_custom_call.1} parent=0 // loop_footer_branch
    %20 = sbr.rel target = $region3
  $region8: #{tpu_custom_call.1} parent=0 // loop_exit
    _

</llo_original>
